<compile_context>
chip_gen: v6e
topology: v6e:2x2x1
jax: 0.10.0
libtpu: 0.0.40
codegen_flags: <defaults>
</compile_context>

<pallas_src>
import jax
import jax.numpy as jnp
import numpy as np
from jax.experimental import pallas as pl
from jax.experimental.pallas import tpu as pltpu


def _round_up(x, m):
    return ((x + m - 1) // m) * m


def _neighbor_attn_kernel(hv_ref, he_ref, mask_ref,
                          wq_ref, wkv_ref, pool_ref, ssum_ref, expand_ref, wo_ref,
                          out_ref):
    neg_inf = jnp.float32(np.finfo(np.float32).min)

    hv = hv_ref[...]                     # [TM, H]       bf16
    he = he_ref[...]                     # [TM, K*Cin]   bf16 (lane-dense)

    # Q replicated into every neighbor block's K-half (1/sqrt(d) pre-folded, V-half zero).
    q_rep = jnp.dot(hv, wq_ref[...], preferred_element_type=jnp.float32)      # [TM, K*2H]
    # Fused K/V projection for all K neighbors at once (block-diagonal weight).
    kv = jnp.dot(he, wkv_ref[...], preferred_element_type=jnp.float32)        # [TM, K*2H]

    # Per-(neighbor, head) logits: elementwise q*k, then pool each head's d lanes (MXU).
    prod = q_rep * kv                                                         # [TM, K*2H]
    logits = jnp.dot(prod, pool_ref[...], preferred_element_type=jnp.float32)  # [TM, K*nh]

    # Masked softmax over neighbors (k-major lanes).  Row max is a constant shift within
    # every (row, head) group -> exact softmax stabilizer, single lane-reduce.
    mask = mask_ref[...].astype(jnp.float32)                                  # [TM, K*nh]
    logits = jnp.where(mask > 0.0, logits, neg_inf)
    row_max = jnp.max(logits, axis=-1, keepdims=True)                         # [TM, 1]
    e = jnp.exp(logits - row_max)
    # Per-head sums over K, broadcast back to every (k, h) lane, via one tiny matmul.
    denom = jnp.dot(e, ssum_ref[...], preferred_element_type=jnp.float32)     # [TM, K*nh]
    attend = e * pl.reciprocal(denom + 1e-30, approx=True) * mask             # [TM, K*nh]

    # Broadcast attention onto each head's V lanes, weight the values, and fold the
    # neighbor reduction + output projection into one matmul (W_O replicated over k,
    # zeros on the K-half rows).
    attend_v = jnp.dot(attend, expand_ref[...], preferred_element_type=jnp.float32)  # [TM, K*2H]
    weighted = attend_v * kv
    out = jnp.dot(weighted, wo_ref[...], preferred_element_type=jnp.float32)         # [TM, H]
    out_ref[...] = out.astype(out_ref.dtype)


def neighbor_attention(h_V, h_E, mask_attend, W_Q, W_K, W_V, W_O,
                       num_heads=4, tile_m=1024, input_dtype=jnp.bfloat16):
    """Pallas forward pass of NeighborAttention.

    h_V:  [B, N, H]     node features
    h_E:  [B, N, K, Ci] neighbor features
    mask: [B, N, K]     attention mask (1/0) or None
    W_*:  PyTorch-style (out, in) weight matrices, no bias.
    """
    B, N, H = h_V.shape
    K, Cin = h_E.shape[2], h_E.shape[3]
    assert H % num_heads == 0
    nh = num_heads
    d = H // nh
    H2 = 2 * H
    M = B * N
    f32 = jnp.float32

    if mask_attend is None:
        mask_attend = jnp.ones((B, N, K), f32)

    # Tile selection: big tiles amortize per-step overhead; clamp for tiny problems.
    tile = _round_up(min(tile_m, _round_up(M, 8)), 8)
    Mp = _round_up(M, tile)
    grid = (Mp // tile,)

    hv = h_V.reshape(M, H)
    he = h_E.reshape(M, K * Cin)                                          # lane-dense
    mask = jnp.repeat(mask_attend.reshape(M, K).astype(f32), nh, axis=1)  # [M, K*nh], k-major
    if Mp != M:
        hv = jnp.pad(hv, ((0, Mp - M), (0, 0)))
        he = jnp.pad(he, ((0, Mp - M), (0, 0)))
        mask = jnp.pad(mask, ((0, Mp - M), (0, 0)))   # padded rows fully masked -> out = 0
    hv = hv.astype(input_dtype)
    he = he.astype(input_dtype)

    # ---- Weights -------------------------------------------------------------------
    scale = np.float32(1.0 / np.sqrt(d))
    # W_Q^T scaled, placed in the K-half of every neighbor block (V-half zero), replicated K times.
    wq_blk = jnp.concatenate([jnp.asarray(W_Q, f32).T * scale,
                              jnp.zeros((H, H), f32)], axis=1)            # [H, 2H]
    wq_rep = jnp.tile(wq_blk, (1, K)).astype(input_dtype)                 # [H, K*2H]
    # Block-diagonal fused K/V projection: block (k,k) = [W_K^T | W_V^T].
    wkv_blk = jnp.concatenate([jnp.asarray(W_K, f32).T,
                               jnp.asarray(W_V, f32).T], axis=1)          # [Cin, 2H]
    wkv_bd = jnp.kron(jnp.eye(K, dtype=f32), wkv_blk).astype(input_dtype)  # [K*Cin, K*2H]
    # W_O^T on the V-half rows of every neighbor block (K-half rows zero) -> fuses the
    # sum over neighbors with the output projection.
    wo_blk = jnp.concatenate([jnp.zeros((H, H), f32),
                              jnp.asarray(W_O, f32).T], axis=0)           # [2H, H]
    wo_rep = jnp.tile(wo_blk, (K, 1))                                     # [K*2H, H], f32

    # Constant 0/1 head-structure matrices (f32; used with f32 activations on the MXU).
    pool_np = np.zeros((K * H2, K * nh), np.float32)    # sum a head's d K-lanes -> logit
    expand_np = np.zeros((K * nh, K * H2), np.float32)  # broadcast attend onto V lanes
    for k in range(K):
        for h in range(nh):
            pool_np[k * H2 + h * d: k * H2 + (h + 1) * d, k * nh + h] = 1.0
            expand_np[k * nh + h, k * H2 + H + h * d: k * H2 + H + (h + 1) * d] = 1.0
    ssum_np = np.zeros((K * nh, K * nh), np.float32)    # sum over K per head, broadcast back
    for h in range(nh):
        idx = np.arange(K) * nh + h
        ssum_np[np.ix_(idx, idx)] = 1.0
    pool = jnp.asarray(pool_np)
    ssum = jnp.asarray(ssum_np)
    expand = jnp.asarray(expand_np)

    out = pl.pallas_call(
        _neighbor_attn_kernel,
        out_shape=jax.ShapeDtypeStruct((Mp, H), jnp.float32),
        grid_spec=pltpu.PrefetchScalarGridSpec(
            num_scalar_prefetch=0,
            grid=grid,
            in_specs=[
                pl.BlockSpec((tile, H), lambda i: (i, 0)),            # h_V tile
                pl.BlockSpec((tile, K * Cin), lambda i: (i, 0)),      # h_E tile (lane-dense)
                pl.BlockSpec((tile, K * nh), lambda i: (i, 0)),       # mask tile (k-major)
                pl.BlockSpec((H, K * H2), lambda i: (0, 0)),          # W_Q replicated/scaled
                pl.BlockSpec((K * Cin, K * H2), lambda i: (0, 0)),    # W_KV block-diagonal
                pl.BlockSpec((K * H2, K * nh), lambda i: (0, 0)),     # head pooling
                pl.BlockSpec((K * nh, K * nh), lambda i: (0, 0)),     # per-head K-sum
                pl.BlockSpec((K * nh, K * H2), lambda i: (0, 0)),     # head expansion
                pl.BlockSpec((K * H2, H), lambda i: (0, 0)),          # W_O replicated (V rows)
            ],
            out_specs=pl.BlockSpec((tile, H), lambda i: (i, 0)),
        ),
        compiler_params=pltpu.CompilerParams(
            dimension_semantics=("parallel",),
            vmem_limit_bytes=48 * 1024 * 1024),
    )(hv, he, mask, wq_rep, wkv_bd, pool, ssum, expand, wo_rep)

    return out[:M].reshape(B, N, H)


def _reference(h_V, h_E, mask_attend, W_Q, W_K, W_V, W_O, num_heads=4):
    """Pure-JAX reference matching the PyTorch forward semantics (f32)."""
    B, N, H = h_V.shape
    K = h_E.shape[2]
    d = H // num_heads
    Q = (h_V @ W_Q.T).reshape(B, N, 1, num_heads, 1, d)
    Kp = (h_E @ W_K.T).reshape(B, N, K, num_heads, d, 1)
    V = (h_E @ W_V.T).reshape(B, N, K, num_heads, d)
    logits = jnp.matmul(Q, Kp).reshape(B, N, K, num_heads)
    logits = jnp.swapaxes(logits, -2, -1) / np.sqrt(d)          # [B,N,heads,K]
    mask = jnp.broadcast_to(mask_attend[:, :, None, :], logits.shape)
    neg_inf = jnp.float32(np.finfo(np.float32).min)
    logits = jnp.where(mask > 0, logits, neg_inf)
    attend = jax.nn.softmax(logits, axis=-1) * mask
    upd = jnp.matmul(attend[..., None, :], jnp.swapaxes(V, 2, 3))
    upd = upd.reshape(B, N, H)
    return upd @ W_O.T


if __name__ == "__main__":
    # Small shapes consistent with the module: B=2, N=16 nodes, K=8 neighbors,
    # num_hidden=32 (4 heads, d=8), num_in=48 edge-feature width.
    # TODO(synk): NeighborAttention.step (single-timestep gather path) is not implemented;
    # only forward() is covered.
    B, N, K = 2, 16, 8
    num_hidden, num_in, num_heads = 32, 48, 4

    key = jax.random.PRNGKey(0)
    k1, k2, k3, k4, k5, k6, k7 = jax.random.split(key, 7)

    h_V = jax.random.normal(k1, (B, N, num_hidden), jnp.float32)
    h_E = jax.random.normal(k2, (B, N, K, num_in), jnp.float32)
    mask_attend = (jax.random.uniform(k3, (B, N, K)) > 0.2).astype(jnp.float32)

    # Deterministic synthetic parameters (PyTorch nn.Linear weight shape: [out, in]).
    W_Q = 0.1 * jax.random.normal(k4, (num_hidden, num_hidden), jnp.float32)
    W_K = 0.1 * jax.random.normal(k5, (num_hidden, num_in), jnp.float32)
    W_V = 0.1 * jax.random.normal(k6, (num_hidden, num_in), jnp.float32)
    W_O = 0.1 * jax.random.normal(k7, (num_hidden, num_hidden), jnp.float32)

    out = neighbor_attention(h_V, h_E, mask_attend, W_Q, W_K, W_V, W_O,
                             num_heads=num_heads)
    out = jax.block_until_ready(out)

    ref = _reference(h_V, h_E, mask_attend, W_Q, W_K, W_V, W_O,
                     num_heads=num_heads)
    # bf16 matmul front-end -> loosened tolerance (softmax / elementwise math stays f32).
    np.testing.assert_allclose(np.asarray(out), np.asarray(ref),
                               rtol=2e-2, atol=2e-2)
    print("KERNEL_OK")
</pallas_src>

<mosaic_0001>
module attributes {stable_mosaic.version = 11 : i64} {
  func.func @_neighbor_attn_kernel(%arg0: i32, %arg1: memref<32x32xbf16, #tpu.memory_space<vmem>>, %arg2: memref<32x384xbf16, #tpu.memory_space<vmem>>, %arg3: memref<32x32xf32, #tpu.memory_space<vmem>>, %arg4: memref<32x512xbf16, #tpu.memory_space<vmem>>, %arg5: memref<384x512xbf16, #tpu.memory_space<vmem>>, %arg6: memref<512x32xf32, #tpu.memory_space<vmem>>, %arg7: memref<32x32xf32, #tpu.memory_space<vmem>>, %arg8: memref<32x512xf32, #tpu.memory_space<vmem>>, %arg9: memref<512x32xf32, #tpu.memory_space<vmem>>, %arg10: memref<32x32xf32, #tpu.memory_space<vmem>>) attributes {dimension_semantics = [#tpu.dimension_semantics<parallel>], iteration_bounds = array<i64: 1>, scalar_prefetch = 0 : i64, scratch_operands = 0 : i64, tpu.core_type = #tpu.core_type<tc>, window_params = [{transform_indices = @transform_0, window_bounds = array<i64: 32, 32>}, {transform_indices = @transform_1, window_bounds = array<i64: 32, 384>}, {transform_indices = @transform_2, window_bounds = array<i64: 32, 32>}, {pipeline_mode = #tpu.pipeline_mode<synchronous>, transform_indices = @transform_3, window_bounds = array<i64: 32, 512>}, {pipeline_mode = #tpu.pipeline_mode<synchronous>, transform_indices = @transform_4, window_bounds = array<i64: 384, 512>}, {pipeline_mode = #tpu.pipeline_mode<synchronous>, transform_indices = @transform_5, window_bounds = array<i64: 512, 32>}, {pipeline_mode = #tpu.pipeline_mode<synchronous>, transform_indices = @transform_6, window_bounds = array<i64: 32, 32>}, {pipeline_mode = #tpu.pipeline_mode<synchronous>, transform_indices = @transform_7, window_bounds = array<i64: 32, 512>}, {pipeline_mode = #tpu.pipeline_mode<synchronous>, transform_indices = @transform_8, window_bounds = array<i64: 512, 32>}, {transform_indices = @transform_9, window_bounds = array<i64: 32, 32>}]} {
    %c0 = arith.constant 0 : index
    %c0_0 = arith.constant 0 : index
    %0 = vector.load %arg1[%c0, %c0_0] : memref<32x32xbf16, #tpu.memory_space<vmem>>, vector<32x32xbf16>
    %c0_1 = arith.constant 0 : index
    %c0_2 = arith.constant 0 : index
    %1 = vector.load %arg2[%c0_1, %c0_2] : memref<32x384xbf16, #tpu.memory_space<vmem>>, vector<32x384xbf16>
    %c0_3 = arith.constant 0 : index
    %c0_4 = arith.constant 0 : index
    %2 = vector.load %arg4[%c0_3, %c0_4] : memref<32x512xbf16, #tpu.memory_space<vmem>>, vector<32x512xbf16>
    %cst = arith.constant dense<0.000000e+00> : vector<32x512xf32>
    %3 = tpu.matmul %0, %2, %cst {dimension_numbers = #tpu.dot_dimension_numbers<[1], [0], [0], [1], [0, 0, 1, 1], [], []>} : vector<32x32xbf16>, vector<32x512xbf16>, vector<32x512xf32> -> vector<32x512xf32>
    %c0_5 = arith.constant 0 : index
    %c0_6 = arith.constant 0 : index
    %4 = vector.load %arg5[%c0_5, %c0_6] : memref<384x512xbf16, #tpu.memory_space<vmem>>, vector<384x512xbf16>
    %cst_7 = arith.constant dense<0.000000e+00> : vector<32x512xf32>
    %5 = tpu.matmul %1, %4, %cst_7 {dimension_numbers = #tpu.dot_dimension_numbers<[1], [0], [0], [1], [0, 0, 1, 1], [], []>} : vector<32x384xbf16>, vector<384x512xbf16>, vector<32x512xf32> -> vector<32x512xf32>
    %6 = arith.mulf %3, %5 : vector<32x512xf32>
    %c0_8 = arith.constant 0 : index
    %c0_9 = arith.constant 0 : index
    %7 = vector.load %arg6[%c0_8, %c0_9] : memref<512x32xf32, #tpu.memory_space<vmem>>, vector<512x32xf32>
    %cst_10 = arith.constant dense<0.000000e+00> : vector<32x32xf32>
    %8 = tpu.matmul %6, %7, %cst_10 {dimension_numbers = #tpu.dot_dimension_numbers<[1], [0], [0], [1], [0, 0, 1, 1], [], []>} : vector<32x512xf32>, vector<512x32xf32>, vector<32x32xf32> -> vector<32x32xf32>
    %c0_11 = arith.constant 0 : index
    %c0_12 = arith.constant 0 : index
    %9 = vector.load %arg3[%c0_11, %c0_12] : memref<32x32xf32, #tpu.memory_space<vmem>>, vector<32x32xf32>
    %cst_13 = arith.constant 0.000000e+00 : f32
    %10 = vector.broadcast %cst_13 : f32 to vector<32x32xf32>
    %11 = arith.cmpf ogt, %9, %10 : vector<32x32xf32>
    %cst_14 = arith.constant -3.40282347E+38 : f32
    %12 = vector.broadcast %cst_14 : f32 to vector<32x32xf32>
    %13 = arith.select %11, %8, %12 : vector<32x32xi1>, vector<32x32xf32>
    %cst_15 = arith.constant dense<0xFF800000> : vector<32xf32>
    %14 = vector.multi_reduction <maximumf>, %13, %cst_15 [1] : vector<32x32xf32> to vector<32xf32>
    %15 = vector.shape_cast %14 : vector<32xf32> to vector<32x1xf32>
    %16 = vector.broadcast %15 : vector<32x1xf32> to vector<32x32xf32>
    %17 = arith.subf %13, %16 : vector<32x32xf32>
    %18 = math.exp %17 : vector<32x32xf32>
    %c0_16 = arith.constant 0 : index
    %c0_17 = arith.constant 0 : index
    %19 = vector.load %arg7[%c0_16, %c0_17] : memref<32x32xf32, #tpu.memory_space<vmem>>, vector<32x32xf32>
    %cst_18 = arith.constant dense<0.000000e+00> : vector<32x32xf32>
    %20 = tpu.matmul %18, %19, %cst_18 {dimension_numbers = #tpu.dot_dimension_numbers<[1], [0], [0], [1], [0, 0, 1, 1], [], []>} : vector<32x32xf32>, vector<32x32xf32>, vector<32x32xf32> -> vector<32x32xf32>
    %cst_19 = arith.constant 1.000000e-30 : f32
    %21 = vector.broadcast %cst_19 : f32 to vector<32x32xf32>
    %22 = arith.addf %20, %21 : vector<32x32xf32>
    %23 = tpu.reciprocal %22 {approx = true} : vector<32x32xf32> -> vector<32x32xf32>
    %24 = arith.mulf %18, %23 : vector<32x32xf32>
    %25 = arith.mulf %24, %9 : vector<32x32xf32>
    %c0_20 = arith.constant 0 : index
    %c0_21 = arith.constant 0 : index
    %26 = vector.load %arg8[%c0_20, %c0_21] : memref<32x512xf32, #tpu.memory_space<vmem>>, vector<32x512xf32>
    %cst_22 = arith.constant dense<0.000000e+00> : vector<32x512xf32>
    %27 = tpu.matmul %25, %26, %cst_22 {dimension_numbers = #tpu.dot_dimension_numbers<[1], [0], [0], [1], [0, 0, 1, 1], [], []>} : vector<32x32xf32>, vector<32x512xf32>, vector<32x512xf32> -> vector<32x512xf32>
    %28 = arith.mulf %27, %5 : vector<32x512xf32>
    %c0_23 = arith.constant 0 : index
    %c0_24 = arith.constant 0 : index
    %29 = vector.load %arg9[%c0_23, %c0_24] : memref<512x32xf32, #tpu.memory_space<vmem>>, vector<512x32xf32>
    %cst_25 = arith.constant dense<0.000000e+00> : vector<32x32xf32>
    %30 = tpu.matmul %28, %29, %cst_25 {dimension_numbers = #tpu.dot_dimension_numbers<[1], [0], [0], [1], [0, 0, 1, 1], [], []>} : vector<32x512xf32>, vector<512x32xf32>, vector<32x32xf32> -> vector<32x32xf32>
    %c0_26 = arith.constant 0 : index
    %c0_27 = arith.constant 0 : index
    %31 = vector.load %arg10[%c0_26, %c0_27] : memref<32x32xf32, #tpu.memory_space<vmem>>, vector<32x32xf32>
    tpu.vector_store %arg10[%c0_26, %c0_27], %30 {strides = array<i32>} : memref<32x32xf32, #tpu.memory_space<vmem>>, vector<32x32xf32>,
    return
  }
  func.func @transform_0(%arg0: i32) -> (i32, i32) {
    %c0_i32 = arith.constant 0 : i32
    %c0_i32_0 = arith.constant 0 : i32
    return %arg0, %c0_i32 : i32, i32
  }
  func.func @transform_1(%arg0: i32) -> (i32, i32) {
    %c0_i32 = arith.constant 0 : i32
    %c0_i32_0 = arith.constant 0 : i32
    return %arg0, %c0_i32 : i32, i32
  }
  func.func @transform_2(%arg0: i32) -> (i32, i32) {
    %c0_i32 = arith.constant 0 : i32
    %c0_i32_0 = arith.constant 0 : i32
    return %arg0, %c0_i32 : i32, i32
  }
  func.func @transform_3(%arg0: i32) -> (i32, i32) {
    %c0_i32 = arith.constant 0 : i32
    %c0_i32_0 = arith.constant 0 : i32
    %c0_i32_1 = arith.constant 0 : i32
    return %c0_i32, %c0_i32_0 : i32, i32
  }
  func.func @transform_4(%arg0: i32) -> (i32, i32) {
    %c0_i32 = arith.constant 0 : i32
    %c0_i32_0 = arith.constant 0 : i32
    %c0_i32_1 = arith.constant 0 : i32
    return %c0_i32, %c0_i32_0 : i32, i32
  }
  func.func @transform_5(%arg0: i32) -> (i32, i32) {
    %c0_i32 = arith.constant 0 : i32
    %c0_i32_0 = arith.constant 0 : i32
    %c0_i32_1 = arith.constant 0 : i32
    return %c0_i32, %c0_i32_0 : i32, i32
  }
  func.func @transform_6(%arg0: i32) -> (i32, i32) {
    %c0_i32 = arith.constant 0 : i32
    %c0_i32_0 = arith.constant 0 : i32
    %c0_i32_1 = arith.constant 0 : i32
    return %c0_i32, %c0_i32_0 : i32, i32
  }
  func.func @transform_7(%arg0: i32) -> (i32, i32) {
    %c0_i32 = arith.constant 0 : i32
    %c0_i32_0 = arith.constant 0 : i32
    %c0_i32_1 = arith.constant 0 : i32
    return %c0_i32, %c0_i32_0 : i32, i32
  }
  func.func @transform_8(%arg0: i32) -> (i32, i32) {
    %c0_i32 = arith.constant 0 : i32
    %c0_i32_0 = arith.constant 0 : i32
    %c0_i32_1 = arith.constant 0 : i32
    return %c0_i32, %c0_i32_0 : i32, i32
  }
  func.func @transform_9(%arg0: i32) -> (i32, i32) {
    %c0_i32 = arith.constant 0 : i32
    %c0_i32_0 = arith.constant 0 : i32
    return %arg0, %c0_i32 : i32, i32
  }
}

</mosaic_0001>

<llo_original>
// kernel: tpu_custom_call.1
$region0: #{tpu_custom_call.1}
  #allocation0 [shape = 'u32[]', space=smem, size = 0x4, offset = 0x4, fixed_abs, tag = 'smem constant byte address 0x4 - core index']
  #allocation1 [shape = 'u32[144,128]{1,0:T(1,128)}', space=vmem, size = 0x12000, scoped, tag = 'internal scratch']
  %s0 = inlined_call_operand.vmem [shape: bf16[32,32], index: 0, kind: input, shape index: {}]
  %s1 = inlined_call_operand.vmem [shape: bf16[32,384], index: 1, kind: input, shape index: {}]
  %s2 = inlined_call_operand.vmem [shape: f32[32,32], index: 2, kind: input, shape index: {}]
  %s3 = inlined_call_operand.vmem [shape: bf16[32,512], index: 3, kind: input, shape index: {}]
  %s4 = inlined_call_operand.vmem [shape: bf16[384,512], index: 4, kind: input, shape index: {}]
  %s5 = inlined_call_operand.vmem [shape: f32[512,32], index: 5, kind: input, shape index: {}]
  %s6 = inlined_call_operand.vmem [shape: f32[32,32], index: 6, kind: input, shape index: {}]
  %s7 = inlined_call_operand.vmem [shape: f32[32,512], index: 7, kind: input, shape index: {}]
  %s8 = inlined_call_operand.vmem [shape: f32[512,32], index: 8, kind: input, shape index: {}]
  %s9 = inlined_call_operand.hbm [shape: f32[32,32], index: 9, kind: output, shape index: {}]
  %s10 = sld [smem:[#allocation0]]
  $region46: #{tpu_custom_call.1} parent=0
    _
  %s12 = ssub.s32 1, %s10
  %s13 = scalar_select 0, %s12, %s10
  $region1: #{tpu_custom_call.1} parent=0
    #allocation2 [shape = 'u8[16384]{0}', space=vmem, size = 0x4000, scoped, tag = 'output window, operand 0, single buffered']
    #allocation3 [shape = 's32[1]{0}', space=sflag, size = 0x4, scoped, tag = 'scoped memory for tpu_custom_call.1']
    %14 = vsyncpa [#allocation3], 0
    // Predicated region
    $region2: #{tpu_custom_call.1} parent=1 // pred_check
      _
    $region3: #{tpu_custom_call.1} parent=1 // pred_check_branch
      %16 = sbr.rel (0) target = $region5
    $region4: #{tpu_custom_call.1} parent=1 // pred_region
      _
    $region5: #{tpu_custom_call.1} parent=1 // pred_fallthru
      _
    // Predicated region
    $region6: #{tpu_custom_call.1} parent=1 // pred_check
      _
    $region7: #{tpu_custom_call.1} parent=1 // pred_check_branch
      %18 = sbr.rel (0) target = $region9
    $region8: #{tpu_custom_call.1} parent=1 // pred_region
      _
    $region9: #{tpu_custom_call.1} parent=1 // pred_fallthru
      _
    // Predicated region
    $region10: #{tpu_custom_call.1} parent=1 // pred_check
      _
    $region11: #{tpu_custom_call.1} parent=1 // pred_check_branch
      %20 = sbr.rel (0) target = $region13
    $region12: #{tpu_custom_call.1} parent=1 // pred_region
      _
    $region13: #{tpu_custom_call.1} parent=1 // pred_fallthru
      _
    // Predicated region
    $region14: #{tpu_custom_call.1} parent=1 // pred_check
      _
    $region15: #{tpu_custom_call.1} parent=1 // pred_check_branch
      %22 = sbr.rel (0) target = $region17
    $region16: #{tpu_custom_call.1} parent=1 // pred_region
      _
    $region17: #{tpu_custom_call.1} parent=1 // pred_fallthru
      _
    // Predicated region
    $region18: #{tpu_custom_call.1} parent=1 // pred_check
      _
    $region19: #{tpu_custom_call.1} parent=1 // pred_check_branch
      %24 = sbr.rel (0) target = $region21
    $region20: #{tpu_custom_call.1} parent=1 // pred_region
      _
    $region21: #{tpu_custom_call.1} parent=1 // pred_fallthru
      _
    // Predicated region
    $region22: #{tpu_custom_call.1} parent=1 // pred_check
      _
    $region23: #{tpu_custom_call.1} parent=1 // pred_check_branch
      %26 = sbr.rel (0) target = $region25
    $region24: #{tpu_custom_call.1} parent=1 // pred_region
      _
    $region25: #{tpu_custom_call.1} parent=1 // pred_fallthru
      _
    // Predicated region
    $region26: #{tpu_custom_call.1} parent=1 // pred_check
      _
    $region27: #{tpu_custom_call.1} parent=1 // pred_check_branch
      %28 = sbr.rel (0) target = $region29
    $region28: #{tpu_custom_call.1} parent=1 // pred_region
      _
    $region29: #{tpu_custom_call.1} parent=1 // pred_fallthru
      _
    // Predicated region
    $region30: #{tpu_custom_call.1} parent=1 // pred_check
      _
    $region31: #{tpu_custom_call.1} parent=1 // pred_check_branch
      %30 = sbr.rel (0) target = $region33
    $region32: #{tpu_custom_call.1} parent=1 // pred_region
      _
    $region33: #{tpu_custom_call.1} parent=1 // pred_fallthru
      _
    // Predicated region
    $region34: #{tpu_custom_call.1} parent=1 // pred_check
      _
    $region35: #{tpu_custom_call.1} parent=1 // pred_check_branch
      %32 = sbr.rel (0) target = $region37
    $region36: #{tpu_custom_call.1} parent=1 // pred_region
      _
    $region37: #{tpu_custom_call.1} parent=1 // pred_fallthru
      _
    %v34 = vld [vmem:[%s0] sm:$0xf]
    %v35 = vld [vmem:[%s0 + $0x4] sm:$0xf]
    %v36 = vld [vmem:[%s0 + $0x8] sm:$0xf]
    %v37 = vld [vmem:[%s0 + $0xc] sm:$0xf]
    %v38 = vld [vmem:[%s1] sm:$0xff]
    %v39 = vld [vmem:[%s1 + $0x8] sm:$0xf]
    %v40 = vld [vmem:[%s1 + $0xc] sm:$0xff]
    %v41 = vld [vmem:[%s1 + $0x14] sm:$0xf]
    %v42 = vld [vmem:[%s1 + $0x18] sm:$0xff]
    %v43 = vld [vmem:[%s1 + $0x20] sm:$0xf]
    %v44 = vld [vmem:[%s1 + $0x24] sm:$0xff]
    %v45 = vld [vmem:[%s1 + $0x2c] sm:$0xf]
    %v46 = vld [vmem:[%s3] sm:$0xff]
    %v47 = vld [vmem:[%s3 + $0x8] sm:$0xff]
    %v48 = vld [vmem:[%s3 + $0x10] sm:$0xff]
    %v49 = vld [vmem:[%s3 + $0x18] sm:$0xff]
    %v50 = vld [vmem:[%s3 + $0x20] sm:$0xff]
    %v51 = vld [vmem:[%s3 + $0x28] sm:$0xff]
    %v52 = vld [vmem:[%s3 + $0x30] sm:$0xff]
    %v53 = vld [vmem:[%s3 + $0x38] sm:$0xff]
    %v58 = vunpack.c.l.b16 %v34
    %v59 = vunpack.c.l.b16 %v35
    %v60 = vunpack.c.l.b16 %v36
    %v61 = vunpack.c.l.b16 %v37
    %v62 = vpack.c.b16 %v59, %v58
    %v63 = vpack.c.b16 %v61, %v60
    %v72 = vunpack.c.l.b16 %v46
    %v73 = vunpack.c.h.b16 %v46
    %v74 = vunpack.c.l.b16 %v47
    %v75 = vunpack.c.h.b16 %v47
    %v76 = vunpack.c.l.b16 %v48
    %v77 = vunpack.c.h.b16 %v48
    %v78 = vunpack.c.l.b16 %v49
    %v79 = vunpack.c.h.b16 %v49
    %v80 = vunpack.c.l.b16 %v50
    %v81 = vunpack.c.h.b16 %v50
    %v82 = vunpack.c.l.b16 %v51
    %v83 = vunpack.c.h.b16 %v51
    %v84 = vunpack.c.l.b16 %v52
    %v85 = vunpack.c.h.b16 %v52
    %v86 = vunpack.c.l.b16 %v53
    %v87 = vunpack.c.h.b16 %v53
    %v88 = vpack.c.b16 %v76, %v72
    %v89 = vpack.c.b16 %v77, %v73
    %v90 = vpack.c.b16 %v78, %v74
    %v91 = vpack.c.b16 %v79, %v75
    %v92 = vpack.c.b16 %v84, %v80
    %v93 = vpack.c.b16 %v85, %v81
    %v94 = vpack.c.b16 %v86, %v82
    %v95 = vpack.c.b16 %v87, %v83
    %vm104 = vcmask 261120
    %v106 = vsel %vm104, %v62, 0
    %v109 = vsel %vm104, %v63, 0
    %111 = vmatprep.subr.bf16.mxu0 0
    %112 = vmatpush1.bf16.msra.mxu0 0
    %113 = vmatprep.subr.bf16.mxu0 0
    %114 = vmatpush1.bf16.msra.mxu0 0
    %115 = vmatprep.subr.bf16.mxu0 0
    %116 = vmatpush1.bf16.msra.mxu0 0
    %117 = vmatprep.subr.bf16.mxu0 0
    %118 = vmatpush1.bf16.msra.mxu0 0
    %119 = vmatprep.subr.bf16.mxu0 0
    %120 = vmatpush1.bf16.msra.mxu0 0
    %121 = vmatprep.subr.bf16.mxu0 0
    %122 = vmatpush1.bf16.msra.mxu0 0
    %123 = vmatprep.subr.bf16.mxu0 %v93
    %124 = vmatpush1.bf16.msra.mxu0 %v92
    %125 = vmatprep.subr.bf16.mxu0 %v89
    %126 = vmatpush1.bf16.msra.mxu0 %v88
    %127 = vmatprep.subr.bf16.mxu0 0
    %128 = vmatpush2.bf16.msra.mxu0 0
    %129 = vmatprep.subr.bf16.mxu0 0
    %130 = vmatpush2.bf16.msra.mxu0 0
    %131 = vmatprep.subr.bf16.mxu0 0
    %132 = vmatpush2.bf16.msra.mxu0 0
    %133 = vmatprep.subr.bf16.mxu0 0
    %134 = vmatpush2.bf16.msra.mxu0 0
    %135 = vmatprep.subr.bf16.mxu0 0
    %136 = vmatpush2.bf16.msra.mxu0 0
    %137 = vmatprep.subr.bf16.mxu0 0
    %138 = vmatpush2.bf16.msra.mxu0 0
    %139 = vmatprep.subr.bf16.mxu0 0
    %140 = vmatpush2.bf16.msra.mxu0 0
    %141 = vmatprep.subr.bf16.mxu0 0
    %142 = vmatpush2.bf16.msra.mxu0 0
    %143 = vmatprep.mubr.bf16.mxu0 0
    %144 = vmatmul.mubr.bf16.gmra.mxu0 %v106
    %v145 = vpop.f32.mrf.mxu0
    %v146 = vadd.f32 0.0, %v145
    %v147 = vpop.f32.mrf.mxu0
    %v148 = vadd.f32 0.0, %v147
    %v149 = vpop.f32.mrf.mxu0
    %v150 = vadd.f32 0.0, %v149
    %v151 = vpop.f32.mrf.mxu0
    %v152 = vadd.f32 0.0, %v151
    %153 = vmatprep.mubr.bf16.mxu0 0
    %154 = vmatmul.mubr.bf16.gmra.mxu0 %v109
    %v155 = vpop.f32.mrf.mxu0
    %v156 = vadd.f32 0.0, %v155
    %v157 = vpop.f32.mrf.mxu0
    %v158 = vadd.f32 0.0, %v157
    %v159 = vpop.f32.mrf.mxu0
    %v160 = vadd.f32 0.0, %v159
    %v161 = vpop.f32.mrf.mxu0
    %v162 = vadd.f32 0.0, %v161
    %163 = vdwg.mxu0
    %164 = vmatprep.subr.bf16.mxu0 0
    %165 = vmatpush1.bf16.msra.mxu0 0
    %166 = vmatprep.subr.bf16.mxu0 0
    %167 = vmatpush1.bf16.msra.mxu0 0
    %168 = vmatprep.subr.bf16.mxu0 0
    %169 = vmatpush1.bf16.msra.mxu0 0
    %170 = vmatprep.subr.bf16.mxu0 0
    %171 = vmatpush1.bf16.msra.mxu0 0
    %172 = vmatprep.subr.bf16.mxu0 0
    %173 = vmatpush1.bf16.msra.mxu0 0
    %174 = vmatprep.subr.bf16.mxu0 0
    %175 = vmatpush1.bf16.msra.mxu0 0
    %176 = vmatprep.subr.bf16.mxu0 %v95
    %177 = vmatpush1.bf16.msra.mxu0 %v94
    %178 = vmatprep.subr.bf16.mxu0 %v91
    %179 = vmatpush1.bf16.msra.mxu0 %v90
    %180 = vmatprep.subr.bf16.mxu0 0
    %181 = vmatpush2.bf16.msra.mxu0 0
    %182 = vmatprep.subr.bf16.mxu0 0
    %183 = vmatpush2.bf16.msra.mxu0 0
    %184 = vmatprep.subr.bf16.mxu0 0
    %185 = vmatpush2.bf16.msra.mxu0 0
    %186 = vmatprep.subr.bf16.mxu0 0
    %187 = vmatpush2.bf16.msra.mxu0 0
    %188 = vmatprep.subr.bf16.mxu0 0
    %189 = vmatpush2.bf16.msra.mxu0 0
    %190 = vmatprep.subr.bf16.mxu0 0
    %191 = vmatpush2.bf16.msra.mxu0 0
    %192 = vmatprep.subr.bf16.mxu0 0
    %193 = vmatpush2.bf16.msra.mxu0 0
    %194 = vmatprep.subr.bf16.mxu0 0
    %195 = vmatpush2.bf16.msra.mxu0 0
    %196 = vmatprep.mubr.bf16.mxu0 0
    %197 = vmatmul.mubr.bf16.gmra.mxu0 %v106
    %v198 = vpop.f32.mrf.mxu0
    %v199 = vadd.f32 0.0, %v198
    %v200 = vpop.f32.mrf.mxu0
    %v201 = vadd.f32 0.0, %v200
    %v202 = vpop.f32.mrf.mxu0
    %v203 = vadd.f32 0.0, %v202
    %v204 = vpop.f32.mrf.mxu0
    %v205 = vadd.f32 0.0, %v204
    %206 = vmatprep.mubr.bf16.mxu0 0
    %207 = vmatmul.mubr.bf16.gmra.mxu0 %v109
    %v208 = vpop.f32.mrf.mxu0
    %v209 = vadd.f32 0.0, %v208
    %v210 = vpop.f32.mrf.mxu0
    %v211 = vadd.f32 0.0, %v210
    %v212 = vpop.f32.mrf.mxu0
    %v213 = vadd.f32 0.0, %v212
    %v214 = vpop.f32.mrf.mxu0
    %v215 = vadd.f32 0.0, %v214
    %216 = vdwg.mxu0
    %v217 = vld [vmem:[%s4] sm:$0xff]
    %v218 = vld [vmem:[%s4 + $0x8] sm:$0xff]
    %v219 = vld [vmem:[%s4 + $0x10] sm:$0xff]
    %v220 = vld [vmem:[%s4 + $0x18] sm:$0xff]
    %v221 = vld [vmem:[%s4 + $0x20] sm:$0xff]
    %v222 = vld [vmem:[%s4 + $0x28] sm:$0xff]
    %v223 = vld [vmem:[%s4 + $0x30] sm:$0xff]
    %v224 = vld [vmem:[%s4 + $0x38] sm:$0xff]
    %v225 = vld [vmem:[%s4 + $0x40] sm:$0xff]
    %v226 = vld [vmem:[%s4 + $0x48] sm:$0xff]
    %v227 = vld [vmem:[%s4 + $0x50] sm:$0xff]
    %v228 = vld [vmem:[%s4 + $0x58] sm:$0xff]
    %v229 = vld [vmem:[%s4 + $0x60] sm:$0xff]
    %v230 = vld [vmem:[%s4 + $0x68] sm:$0xff]
    %v231 = vld [vmem:[%s4 + $0x70] sm:$0xff]
    %v232 = vld [vmem:[%s4 + $0x78] sm:$0xff]
    %v233 = vld [vmem:[%s4 + $0x80] sm:$0xff]
    %v234 = vld [vmem:[%s4 + $0x88] sm:$0xff]
    %v235 = vld [vmem:[%s4 + $0x90] sm:$0xff]
    %v236 = vld [vmem:[%s4 + $0x98] sm:$0xff]
    %v237 = vld [vmem:[%s4 + $0xa0] sm:$0xff]
    %v238 = vld [vmem:[%s4 + $0xa8] sm:$0xff]
    %v239 = vld [vmem:[%s4 + $0xb0] sm:$0xff]
    %v240 = vld [vmem:[%s4 + $0xb8] sm:$0xff]
    %v241 = vld [vmem:[%s4 + $0xc0] sm:$0xff]
    %v242 = vld [vmem:[%s4 + $0xc8] sm:$0xff]
    %v243 = vld [vmem:[%s4 + $0xd0] sm:$0xff]
    %v244 = vld [vmem:[%s4 + $0xd8] sm:$0xff]
    %v245 = vld [vmem:[%s4 + $0xe0] sm:$0xff]
    %v246 = vld [vmem:[%s4 + $0xe8] sm:$0xff]
    %v247 = vld [vmem:[%s4 + $0xf0] sm:$0xff]
    %v248 = vld [vmem:[%s4 + $0xf8] sm:$0xff]
    %v249 = vld [vmem:[%s4 + $0x100] sm:$0xff]
    %v250 = vld [vmem:[%s4 + $0x108] sm:$0xff]
    %v251 = vld [vmem:[%s4 + $0x110] sm:$0xff]
    %v252 = vld [vmem:[%s4 + $0x118] sm:$0xff]
    %v253 = vld [vmem:[%s4 + $0x120] sm:$0xff]
    %v254 = vld [vmem:[%s4 + $0x128] sm:$0xff]
    %v255 = vld [vmem:[%s4 + $0x130] sm:$0xff]
    %v256 = vld [vmem:[%s4 + $0x138] sm:$0xff]
    %v257 = vld [vmem:[%s4 + $0x140] sm:$0xff]
    %v258 = vld [vmem:[%s4 + $0x148] sm:$0xff]
    %v259 = vld [vmem:[%s4 + $0x150] sm:$0xff]
    %v260 = vld [vmem:[%s4 + $0x158] sm:$0xff]
    %v261 = vld [vmem:[%s4 + $0x160] sm:$0xff]
    %v262 = vld [vmem:[%s4 + $0x168] sm:$0xff]
    %v263 = vld [vmem:[%s4 + $0x170] sm:$0xff]
    %v264 = vld [vmem:[%s4 + $0x178] sm:$0xff]
    %v265 = vld [vmem:[%s4 + $0x180] sm:$0xff]
    %v266 = vld [vmem:[%s4 + $0x188] sm:$0xff]
    %v267 = vld [vmem:[%s4 + $0x190] sm:$0xff]
    %v268 = vld [vmem:[%s4 + $0x198] sm:$0xff]
    %v269 = vld [vmem:[%s4 + $0x1a0] sm:$0xff]
    %v270 = vld [vmem:[%s4 + $0x1a8] sm:$0xff]
    %v271 = vld [vmem:[%s4 + $0x1b0] sm:$0xff]
    %v272 = vld [vmem:[%s4 + $0x1b8] sm:$0xff]
    %v273 = vld [vmem:[%s4 + $0x1c0] sm:$0xff]
    %v274 = vld [vmem:[%s4 + $0x1c8] sm:$0xff]
    %v275 = vld [vmem:[%s4 + $0x1d0] sm:$0xff]
    %v276 = vld [vmem:[%s4 + $0x1d8] sm:$0xff]
    %v277 = vld [vmem:[%s4 + $0x1e0] sm:$0xff]
    %v278 = vld [vmem:[%s4 + $0x1e8] sm:$0xff]
    %v279 = vld [vmem:[%s4 + $0x1f0] sm:$0xff]
    %v280 = vld [vmem:[%s4 + $0x1f8] sm:$0xff]
    %v281 = vld [vmem:[%s4 + $0x200] sm:$0xff]
    %v282 = vld [vmem:[%s4 + $0x208] sm:$0xff]
    %v283 = vld [vmem:[%s4 + $0x210] sm:$0xff]
    %v284 = vld [vmem:[%s4 + $0x218] sm:$0xff]
    %v285 = vld [vmem:[%s4 + $0x220] sm:$0xff]
    %v286 = vld [vmem:[%s4 + $0x228] sm:$0xff]
    %v287 = vld [vmem:[%s4 + $0x230] sm:$0xff]
    %v288 = vld [vmem:[%s4 + $0x238] sm:$0xff]
    %v289 = vld [vmem:[%s4 + $0x240] sm:$0xff]
    %v290 = vld [vmem:[%s4 + $0x248] sm:$0xff]
    %v291 = vld [vmem:[%s4 + $0x250] sm:$0xff]
    %v292 = vld [vmem:[%s4 + $0x258] sm:$0xff]
    %v293 = vld [vmem:[%s4 + $0x260] sm:$0xff]
    %v294 = vld [vmem:[%s4 + $0x268] sm:$0xff]
    %v295 = vld [vmem:[%s4 + $0x270] sm:$0xff]
    %v296 = vld [vmem:[%s4 + $0x278] sm:$0xff]
    %v297 = vld [vmem:[%s4 + $0x280] sm:$0xff]
    %v298 = vld [vmem:[%s4 + $0x288] sm:$0xff]
    %v299 = vld [vmem:[%s4 + $0x290] sm:$0xff]
    %v300 = vld [vmem:[%s4 + $0x298] sm:$0xff]
    %v301 = vld [vmem:[%s4 + $0x2a0] sm:$0xff]
    %v302 = vld [vmem:[%s4 + $0x2a8] sm:$0xff]
    %v303 = vld [vmem:[%s4 + $0x2b0] sm:$0xff]
    %v304 = vld [vmem:[%s4 + $0x2b8] sm:$0xff]
    %v305 = vld [vmem:[%s4 + $0x2c0] sm:$0xff]
    %v306 = vld [vmem:[%s4 + $0x2c8] sm:$0xff]
    %v307 = vld [vmem:[%s4 + $0x2d0] sm:$0xff]
    %v308 = vld [vmem:[%s4 + $0x2d8] sm:$0xff]
    %v309 = vld [vmem:[%s4 + $0x2e0] sm:$0xff]
    %v310 = vld [vmem:[%s4 + $0x2e8] sm:$0xff]
    %v311 = vld [vmem:[%s4 + $0x2f0] sm:$0xff]
    %v312 = vld [vmem:[%s4 + $0x2f8] sm:$0xff]
    %v321 = vunpack.c.l.b16 %v38
    %v322 = vunpack.c.h.b16 %v38
    %v323 = vunpack.c.l.b16 %v39
    %v324 = vunpack.c.l.b16 %v40
    %v325 = vunpack.c.h.b16 %v40
    %v326 = vunpack.c.l.b16 %v41
    %v327 = vunpack.c.l.b16 %v42
    %v328 = vunpack.c.h.b16 %v42
    %v329 = vunpack.c.l.b16 %v43
    %v330 = vunpack.c.l.b16 %v44
    %v331 = vunpack.c.h.b16 %v44
    %v332 = vunpack.c.l.b16 %v45
    %v333 = vpack.c.b16 %v324, %v321
    %v334 = vpack.c.b16 %v325, %v322
    %v335 = vpack.c.b16 %v326, %v323
    %v336 = vpack.c.b16 %v330, %v327
    %v337 = vpack.c.b16 %v331, %v328
    %v338 = vpack.c.b16 %v332, %v329
    %v441 = vunpack.c.l.b16 %v217
    %v442 = vunpack.c.h.b16 %v217
    %v443 = vunpack.c.l.b16 %v218
    %v444 = vunpack.c.h.b16 %v218
    %v445 = vunpack.c.l.b16 %v219
    %v446 = vunpack.c.h.b16 %v219
    %v447 = vunpack.c.l.b16 %v220
    %v448 = vunpack.c.h.b16 %v220
    %v449 = vunpack.c.l.b16 %v221
    %v450 = vunpack.c.h.b16 %v221
    %v451 = vunpack.c.l.b16 %v222
    %v452 = vunpack.c.h.b16 %v222
    %v453 = vunpack.c.l.b16 %v223
    %v454 = vunpack.c.h.b16 %v223
    %v455 = vunpack.c.l.b16 %v224
    %v456 = vunpack.c.h.b16 %v224
    %v457 = vunpack.c.l.b16 %v225
    %v458 = vunpack.c.h.b16 %v225
    %v459 = vunpack.c.l.b16 %v226
    %v460 = vunpack.c.h.b16 %v226
    %v461 = vunpack.c.l.b16 %v227
    %v462 = vunpack.c.h.b16 %v227
    %v463 = vunpack.c.l.b16 %v228
    %v464 = vunpack.c.h.b16 %v228
    %v465 = vunpack.c.l.b16 %v229
    %v466 = vunpack.c.h.b16 %v229
    %v467 = vunpack.c.l.b16 %v230
    %v468 = vunpack.c.h.b16 %v230
    %v469 = vunpack.c.l.b16 %v231
    %v470 = vunpack.c.h.b16 %v231
    %v471 = vunpack.c.l.b16 %v232
    %v472 = vunpack.c.h.b16 %v232
    %v473 = vunpack.c.l.b16 %v233
    %v474 = vunpack.c.h.b16 %v233
    %v475 = vunpack.c.l.b16 %v234
    %v476 = vunpack.c.h.b16 %v234
    %v477 = vunpack.c.l.b16 %v235
    %v478 = vunpack.c.h.b16 %v235
    %v479 = vunpack.c.l.b16 %v236
    %v480 = vunpack.c.h.b16 %v236
    %v481 = vunpack.c.l.b16 %v237
    %v482 = vunpack.c.h.b16 %v237
    %v483 = vunpack.c.l.b16 %v238
    %v484 = vunpack.c.h.b16 %v238
    %v485 = vunpack.c.l.b16 %v239
    %v486 = vunpack.c.h.b16 %v239
    %v487 = vunpack.c.l.b16 %v240
    %v488 = vunpack.c.h.b16 %v240
    %v489 = vunpack.c.l.b16 %v241
    %v490 = vunpack.c.h.b16 %v241
    %v491 = vunpack.c.l.b16 %v242
    %v492 = vunpack.c.h.b16 %v242
    %v493 = vunpack.c.l.b16 %v243
    %v494 = vunpack.c.h.b16 %v243
    %v495 = vunpack.c.l.b16 %v244
    %v496 = vunpack.c.h.b16 %v244
    %v497 = vunpack.c.l.b16 %v245
    %v498 = vunpack.c.h.b16 %v245
    %v499 = vunpack.c.l.b16 %v246
    %v500 = vunpack.c.h.b16 %v246
    %v501 = vunpack.c.l.b16 %v247
    %v502 = vunpack.c.h.b16 %v247
    %v503 = vunpack.c.l.b16 %v248
    %v504 = vunpack.c.h.b16 %v248
    %v505 = vunpack.c.l.b16 %v249
    %v506 = vunpack.c.h.b16 %v249
    %v507 = vunpack.c.l.b16 %v250
    %v508 = vunpack.c.h.b16 %v250
    %v509 = vunpack.c.l.b16 %v251
    %v510 = vunpack.c.h.b16 %v251
    %v511 = vunpack.c.l.b16 %v252
    %v512 = vunpack.c.h.b16 %v252
    %v513 = vunpack.c.l.b16 %v253
    %v514 = vunpack.c.h.b16 %v253
    %v515 = vunpack.c.l.b16 %v254
    %v516 = vunpack.c.h.b16 %v254
    %v517 = vunpack.c.l.b16 %v255
    %v518 = vunpack.c.h.b16 %v255
    %v519 = vunpack.c.l.b16 %v256
    %v520 = vunpack.c.h.b16 %v256
    %v521 = vunpack.c.l.b16 %v257
    %v522 = vunpack.c.h.b16 %v257
    %v523 = vunpack.c.l.b16 %v258
    %v524 = vunpack.c.h.b16 %v258
    %v525 = vunpack.c.l.b16 %v259
    %v526 = vunpack.c.h.b16 %v259
    %v527 = vunpack.c.l.b16 %v260
    %v528 = vunpack.c.h.b16 %v260
    %v529 = vunpack.c.l.b16 %v261
    %v530 = vunpack.c.h.b16 %v261
    %v531 = vunpack.c.l.b16 %v262
    %v532 = vunpack.c.h.b16 %v262
    %v533 = vunpack.c.l.b16 %v263
    %v534 = vunpack.c.h.b16 %v263
    %v535 = vunpack.c.l.b16 %v264
    %v536 = vunpack.c.h.b16 %v264
    %v537 = vunpack.c.l.b16 %v265
    %v538 = vunpack.c.h.b16 %v265
    %v539 = vunpack.c.l.b16 %v266
    %v540 = vunpack.c.h.b16 %v266
    %v541 = vunpack.c.l.b16 %v267
    %v542 = vunpack.c.h.b16 %v267
    %v543 = vunpack.c.l.b16 %v268
    %v544 = vunpack.c.h.b16 %v268
    %v545 = vunpack.c.l.b16 %v269
    %v546 = vunpack.c.h.b16 %v269
    %v547 = vunpack.c.l.b16 %v270
    %v548 = vunpack.c.h.b16 %v270
    %v549 = vunpack.c.l.b16 %v271
    %v550 = vunpack.c.h.b16 %v271
    %v551 = vunpack.c.l.b16 %v272
    %v552 = vunpack.c.h.b16 %v272
    %v553 = vunpack.c.l.b16 %v273
    %v554 = vunpack.c.h.b16 %v273
    %v555 = vunpack.c.l.b16 %v274
    %v556 = vunpack.c.h.b16 %v274
    %v557 = vunpack.c.l.b16 %v275
    %v558 = vunpack.c.h.b16 %v275
    %v559 = vunpack.c.l.b16 %v276
    %v560 = vunpack.c.h.b16 %v276
    %v561 = vunpack.c.l.b16 %v277
    %v562 = vunpack.c.h.b16 %v277
    %v563 = vunpack.c.l.b16 %v278
    %v564 = vunpack.c.h.b16 %v278
    %v565 = vunpack.c.l.b16 %v279
    %v566 = vunpack.c.h.b16 %v279
    %v567 = vunpack.c.l.b16 %v280
    %v568 = vunpack.c.h.b16 %v280
    %v569 = vunpack.c.l.b16 %v281
    %v570 = vunpack.c.h.b16 %v281
    %v571 = vunpack.c.l.b16 %v282
    %v572 = vunpack.c.h.b16 %v282
    %v573 = vunpack.c.l.b16 %v283
    %v574 = vunpack.c.h.b16 %v283
    %v575 = vunpack.c.l.b16 %v284
    %v576 = vunpack.c.h.b16 %v284
    %v577 = vunpack.c.l.b16 %v285
    %v578 = vunpack.c.h.b16 %v285
    %v579 = vunpack.c.l.b16 %v286
    %v580 = vunpack.c.h.b16 %v286
    %v581 = vunpack.c.l.b16 %v287
    %v582 = vunpack.c.h.b16 %v287
    %v583 = vunpack.c.l.b16 %v288
    %v584 = vunpack.c.h.b16 %v288
    %v585 = vunpack.c.l.b16 %v289
    %v586 = vunpack.c.h.b16 %v289
    %v587 = vunpack.c.l.b16 %v290
    %v588 = vunpack.c.h.b16 %v290
    %v589 = vunpack.c.l.b16 %v291
    %v590 = vunpack.c.h.b16 %v291
    %v591 = vunpack.c.l.b16 %v292
    %v592 = vunpack.c.h.b16 %v292
    %v593 = vunpack.c.l.b16 %v293
    %v594 = vunpack.c.h.b16 %v293
    %v595 = vunpack.c.l.b16 %v294
    %v596 = vunpack.c.h.b16 %v294
    %v597 = vunpack.c.l.b16 %v295
    %v598 = vunpack.c.h.b16 %v295
    %v599 = vunpack.c.l.b16 %v296
    %v600 = vunpack.c.h.b16 %v296
    %v601 = vunpack.c.l.b16 %v297
    %v602 = vunpack.c.h.b16 %v297
    %v603 = vunpack.c.l.b16 %v298
    %v604 = vunpack.c.h.b16 %v298
    %v605 = vunpack.c.l.b16 %v299
    %v606 = vunpack.c.h.b16 %v299
    %v607 = vunpack.c.l.b16 %v300
    %v608 = vunpack.c.h.b16 %v300
    %v609 = vunpack.c.l.b16 %v301
    %v610 = vunpack.c.h.b16 %v301
    %v611 = vunpack.c.l.b16 %v302
    %v612 = vunpack.c.h.b16 %v302
    %v613 = vunpack.c.l.b16 %v303
    %v614 = vunpack.c.h.b16 %v303
    %v615 = vunpack.c.l.b16 %v304
    %v616 = vunpack.c.h.b16 %v304
    %v617 = vunpack.c.l.b16 %v305
    %v618 = vunpack.c.h.b16 %v305
    %v619 = vunpack.c.l.b16 %v306
    %v620 = vunpack.c.h.b16 %v306
    %v621 = vunpack.c.l.b16 %v307
    %v622 = vunpack.c.h.b16 %v307
    %v623 = vunpack.c.l.b16 %v308
    %v624 = vunpack.c.h.b16 %v308
    %v625 = vunpack.c.l.b16 %v309
    %v626 = vunpack.c.h.b16 %v309
    %v627 = vunpack.c.l.b16 %v310
    %v628 = vunpack.c.h.b16 %v310
    %v629 = vunpack.c.l.b16 %v311
    %v630 = vunpack.c.h.b16 %v311
    %v631 = vunpack.c.l.b16 %v312
    %v632 = vunpack.c.h.b16 %v312
    %v633 = vpack.c.b16 %v445, %v441
    %v634 = vpack.c.b16 %v446, %v442
    %v635 = vpack.c.b16 %v447, %v443
    %v636 = vpack.c.b16 %v448, %v444
    %v637 = vpack.c.b16 %v453, %v449
    %v638 = vpack.c.b16 %v454, %v450
    %v639 = vpack.c.b16 %v455, %v451
    %v640 = vpack.c.b16 %v456, %v452
    %v641 = vpack.c.b16 %v461, %v457
    %v642 = vpack.c.b16 %v462, %v458
    %v643 = vpack.c.b16 %v463, %v459
    %v644 = vpack.c.b16 %v464, %v460
    %v645 = vpack.c.b16 %v469, %v465
    %v646 = vpack.c.b16 %v470, %v466
    %v647 = vpack.c.b16 %v471, %v467
    %v648 = vpack.c.b16 %v472, %v468
    %v649 = vpack.c.b16 %v477, %v473
    %v650 = vpack.c.b16 %v478, %v474
    %v651 = vpack.c.b16 %v479, %v475
    %v652 = vpack.c.b16 %v480, %v476
    %v653 = vpack.c.b16 %v485, %v481
    %v654 = vpack.c.b16 %v486, %v482
    %v655 = vpack.c.b16 %v487, %v483
    %v656 = vpack.c.b16 %v488, %v484
    %v657 = vpack.c.b16 %v493, %v489
    %v658 = vpack.c.b16 %v494, %v490
    %v659 = vpack.c.b16 %v495, %v491
    %v660 = vpack.c.b16 %v496, %v492
    %v661 = vpack.c.b16 %v501, %v497
    %v662 = vpack.c.b16 %v502, %v498
    %v663 = vpack.c.b16 %v503, %v499
    %v664 = vpack.c.b16 %v504, %v500
    %v665 = vpack.c.b16 %v509, %v505
    %v666 = vpack.c.b16 %v510, %v506
    %v667 = vpack.c.b16 %v511, %v507
    %v668 = vpack.c.b16 %v512, %v508
    %v669 = vpack.c.b16 %v517, %v513
    %v670 = vpack.c.b16 %v518, %v514
    %v671 = vpack.c.b16 %v519, %v515
    %v672 = vpack.c.b16 %v520, %v516
    %v673 = vpack.c.b16 %v525, %v521
    %v674 = vpack.c.b16 %v526, %v522
    %v675 = vpack.c.b16 %v527, %v523
    %v676 = vpack.c.b16 %v528, %v524
    %v677 = vpack.c.b16 %v533, %v529
    %v678 = vpack.c.b16 %v534, %v530
    %v679 = vpack.c.b16 %v535, %v531
    %v680 = vpack.c.b16 %v536, %v532
    %v681 = vpack.c.b16 %v541, %v537
    %v682 = vpack.c.b16 %v542, %v538
    %v683 = vpack.c.b16 %v543, %v539
    %v684 = vpack.c.b16 %v544, %v540
    %v685 = vpack.c.b16 %v549, %v545
    %v686 = vpack.c.b16 %v550, %v546
    %v687 = vpack.c.b16 %v551, %v547
    %v688 = vpack.c.b16 %v552, %v548
    %v689 = vpack.c.b16 %v557, %v553
    %v690 = vpack.c.b16 %v558, %v554
    %v691 = vpack.c.b16 %v559, %v555
    %v692 = vpack.c.b16 %v560, %v556
    %v693 = vpack.c.b16 %v565, %v561
    %v694 = vpack.c.b16 %v566, %v562
    %v695 = vpack.c.b16 %v567, %v563
    %v696 = vpack.c.b16 %v568, %v564
    %v697 = vpack.c.b16 %v573, %v569
    %v698 = vpack.c.b16 %v574, %v570
    %v699 = vpack.c.b16 %v575, %v571
    %v700 = vpack.c.b16 %v576, %v572
    %v701 = vpack.c.b16 %v581, %v577
    %v702 = vpack.c.b16 %v582, %v578
    %v703 = vpack.c.b16 %v583, %v579
    %v704 = vpack.c.b16 %v584, %v580
    %v705 = vpack.c.b16 %v589, %v585
    %v706 = vpack.c.b16 %v590, %v586
    %v707 = vpack.c.b16 %v591, %v587
    %v708 = vpack.c.b16 %v592, %v588
    %v709 = vpack.c.b16 %v597, %v593
    %v710 = vpack.c.b16 %v598, %v594
    %v711 = vpack.c.b16 %v599, %v595
    %v712 = vpack.c.b16 %v600, %v596
    %v713 = vpack.c.b16 %v605, %v601
    %v714 = vpack.c.b16 %v606, %v602
    %v715 = vpack.c.b16 %v607, %v603
    %v716 = vpack.c.b16 %v608, %v604
    %v717 = vpack.c.b16 %v613, %v609
    %v718 = vpack.c.b16 %v614, %v610
    %v719 = vpack.c.b16 %v615, %v611
    %v720 = vpack.c.b16 %v616, %v612
    %v721 = vpack.c.b16 %v621, %v617
    %v722 = vpack.c.b16 %v622, %v618
    %v723 = vpack.c.b16 %v623, %v619
    %v724 = vpack.c.b16 %v624, %v620
    %v725 = vpack.c.b16 %v629, %v625
    %v726 = vpack.c.b16 %v630, %v626
    %v727 = vpack.c.b16 %v631, %v627
    %v728 = vpack.c.b16 %v632, %v628
    %825 = vmatprep.subr.bf16.mxu0 %v662
    %826 = vmatpush1.bf16.msra.mxu0 %v661
    %827 = vmatprep.subr.bf16.mxu0 %v658
    %828 = vmatpush1.bf16.msra.mxu0 %v657
    %829 = vmatprep.subr.bf16.mxu0 %v654
    %830 = vmatpush1.bf16.msra.mxu0 %v653
    %831 = vmatprep.subr.bf16.mxu0 %v650
    %832 = vmatpush1.bf16.msra.mxu0 %v649
    %833 = vmatprep.subr.bf16.mxu0 %v646
    %834 = vmatpush1.bf16.msra.mxu0 %v645
    %835 = vmatprep.subr.bf16.mxu0 %v642
    %836 = vmatpush1.bf16.msra.mxu0 %v641
    %837 = vmatprep.subr.bf16.mxu0 %v638
    %838 = vmatpush1.bf16.msra.mxu0 %v637
    %839 = vmatprep.subr.bf16.mxu0 %v634
    %840 = vmatpush1.bf16.msra.mxu0 %v633
    %841 = vmatprep.subr.bf16.mxu0 %v694
    %842 = vmatpush2.bf16.msra.mxu0 %v693
    %843 = vmatprep.subr.bf16.mxu0 %v690
    %844 = vmatpush2.bf16.msra.mxu0 %v689
    %845 = vmatprep.subr.bf16.mxu0 %v686
    %846 = vmatpush2.bf16.msra.mxu0 %v685
    %847 = vmatprep.subr.bf16.mxu0 %v682
    %848 = vmatpush2.bf16.msra.mxu0 %v681
    %849 = vmatprep.subr.bf16.mxu0 %v678
    %850 = vmatpush2.bf16.msra.mxu0 %v677
    %851 = vmatprep.subr.bf16.mxu0 %v674
    %852 = vmatpush2.bf16.msra.mxu0 %v673
    %853 = vmatprep.subr.bf16.mxu0 %v670
    %854 = vmatpush2.bf16.msra.mxu0 %v669
    %855 = vmatprep.subr.bf16.mxu0 %v666
    %856 = vmatpush2.bf16.msra.mxu0 %v665
    %857 = vmatprep.mubr.bf16.mxu0 %v334
    %858 = vmatmul.mubr.bf16.gmra.mxu0 %v333
    %v859 = vpop.f32.mrf.mxu0
    %v860 = vadd.f32 0.0, %v859
    %v861 = vpop.f32.mrf.mxu0
    %v862 = vadd.f32 0.0, %v861
    %v863 = vpop.f32.mrf.mxu0
    %v864 = vadd.f32 0.0, %v863
    %v865 = vpop.f32.mrf.mxu0
    %v866 = vadd.f32 0.0, %v865
    %867 = vmatprep.mubr.bf16.mxu0 %v337
    %868 = vmatmul.mubr.bf16.gmra.mxu0 %v336
    %v869 = vpop.f32.mrf.mxu0
    %v870 = vadd.f32 0.0, %v869
    %v871 = vpop.f32.mrf.mxu0
    %v872 = vadd.f32 0.0, %v871
    %v873 = vpop.f32.mrf.mxu0
    %v874 = vadd.f32 0.0, %v873
    %v875 = vpop.f32.mrf.mxu0
    %v876 = vadd.f32 0.0, %v875
    %877 = vdwg.mxu0
    %878 = vmatprep.subr.bf16.mxu0 %v726
    %879 = vmatpush1.bf16.msra.mxu0 %v725
    %880 = vmatprep.subr.bf16.mxu0 %v722
    %881 = vmatpush1.bf16.msra.mxu0 %v721
    %882 = vmatprep.subr.bf16.mxu0 %v718
    %883 = vmatpush1.bf16.msra.mxu0 %v717
    %884 = vmatprep.subr.bf16.mxu0 %v714
    %885 = vmatpush1.bf16.msra.mxu0 %v713
    %886 = vmatprep.subr.bf16.mxu0 %v710
    %887 = vmatpush1.bf16.msra.mxu0 %v709
    %888 = vmatprep.subr.bf16.mxu0 %v706
    %889 = vmatpush1.bf16.msra.mxu0 %v705
    %890 = vmatprep.subr.bf16.mxu0 %v702
    %891 = vmatpush1.bf16.msra.mxu0 %v701
    %892 = vmatprep.subr.bf16.mxu0 %v698
    %893 = vmatpush1.bf16.msra.mxu0 %v697
    %894 = vmatprep.subr.bf16.mxu0 0
    %895 = vmatpush2.bf16.msra.mxu0 0
    %896 = vmatprep.subr.bf16.mxu0 0
    %897 = vmatpush2.bf16.msra.mxu0 0
    %898 = vmatprep.subr.bf16.mxu0 0
    %899 = vmatpush2.bf16.msra.mxu0 0
    %900 = vmatprep.subr.bf16.mxu0 0
    %901 = vmatpush2.bf16.msra.mxu0 0
    %902 = vmatprep.subr.bf16.mxu0 0
    %903 = vmatpush2.bf16.msra.mxu0 0
    %904 = vmatprep.subr.bf16.mxu0 0
    %905 = vmatpush2.bf16.msra.mxu0 0
    %906 = vmatprep.subr.bf16.mxu0 0
    %907 = vmatpush2.bf16.msra.mxu0 0
    %908 = vmatprep.subr.bf16.mxu0 0
    %909 = vmatpush2.bf16.msra.mxu0 0
    %910 = vmatprep.mubr.bf16.mxu0 0
    %911 = vmatmul.mubr.bf16.gmra.mxu0 %v335
    %v912 = vpop.f32.mrf.mxu0
    %v913 = vadd.f32 %v860, %v912
    %v914 = vpop.f32.mrf.mxu0
    %v915 = vadd.f32 %v862, %v914
    %v916 = vpop.f32.mrf.mxu0
    %v917 = vadd.f32 %v864, %v916
    %v918 = vpop.f32.mrf.mxu0
    %v919 = vadd.f32 %v866, %v918
    %920 = vmatprep.mubr.bf16.mxu0 0
    %921 = vmatmul.mubr.bf16.gmra.mxu0 %v338
    %v922 = vpop.f32.mrf.mxu0
    %v923 = vadd.f32 %v870, %v922
    %v924 = vpop.f32.mrf.mxu0
    %v925 = vadd.f32 %v872, %v924
    %v926 = vpop.f32.mrf.mxu0
    %v927 = vadd.f32 %v874, %v926
    %v928 = vpop.f32.mrf.mxu0
    %v929 = vadd.f32 %v876, %v928
    %930 = vdwg.mxu0
    %931 = vmatprep.subr.bf16.mxu0 %v664
    %932 = vmatpush1.bf16.msra.mxu0 %v663
    %933 = vmatprep.subr.bf16.mxu0 %v660
    %934 = vmatpush1.bf16.msra.mxu0 %v659
    %935 = vmatprep.subr.bf16.mxu0 %v656
    %936 = vmatpush1.bf16.msra.mxu0 %v655
    %937 = vmatprep.subr.bf16.mxu0 %v652
    %938 = vmatpush1.bf16.msra.mxu0 %v651
    %939 = vmatprep.subr.bf16.mxu0 %v648
    %940 = vmatpush1.bf16.msra.mxu0 %v647
    %941 = vmatprep.subr.bf16.mxu0 %v644
    %942 = vmatpush1.bf16.msra.mxu0 %v643
    %943 = vmatprep.subr.bf16.mxu0 %v640
    %944 = vmatpush1.bf16.msra.mxu0 %v639
    %945 = vmatprep.subr.bf16.mxu0 %v636
    %946 = vmatpush1.bf16.msra.mxu0 %v635
    %947 = vmatprep.subr.bf16.mxu0 %v696
    %948 = vmatpush2.bf16.msra.mxu0 %v695
    %949 = vmatprep.subr.bf16.mxu0 %v692
    %950 = vmatpush2.bf16.msra.mxu0 %v691
    %951 = vmatprep.subr.bf16.mxu0 %v688
    %952 = vmatpush2.bf16.msra.mxu0 %v687
    %953 = vmatprep.subr.bf16.mxu0 %v684
    %954 = vmatpush2.bf16.msra.mxu0 %v683
    %955 = vmatprep.subr.bf16.mxu0 %v680
    %956 = vmatpush2.bf16.msra.mxu0 %v679
    %957 = vmatprep.subr.bf16.mxu0 %v676
    %958 = vmatpush2.bf16.msra.mxu0 %v675
    %959 = vmatprep.subr.bf16.mxu0 %v672
    %960 = vmatpush2.bf16.msra.mxu0 %v671
    %961 = vmatprep.subr.bf16.mxu0 %v668
    %962 = vmatpush2.bf16.msra.mxu0 %v667
    %963 = vmatprep.mubr.bf16.mxu0 %v334
    %964 = vmatmul.mubr.bf16.gmra.mxu0 %v333
    %v965 = vpop.f32.mrf.mxu0
    %v966 = vadd.f32 0.0, %v965
    %v967 = vpop.f32.mrf.mxu0
    %v968 = vadd.f32 0.0, %v967
    %v969 = vpop.f32.mrf.mxu0
    %v970 = vadd.f32 0.0, %v969
    %v971 = vpop.f32.mrf.mxu0
    %v972 = vadd.f32 0.0, %v971
    %973 = vmatprep.mubr.bf16.mxu0 %v337
    %974 = vmatmul.mubr.bf16.gmra.mxu0 %v336
    %v975 = vpop.f32.mrf.mxu0
    %v976 = vadd.f32 0.0, %v975
    %v977 = vpop.f32.mrf.mxu0
    %v978 = vadd.f32 0.0, %v977
    %v979 = vpop.f32.mrf.mxu0
    %v980 = vadd.f32 0.0, %v979
    %v981 = vpop.f32.mrf.mxu0
    %v982 = vadd.f32 0.0, %v981
    %983 = vdwg.mxu0
    %984 = vmatprep.subr.bf16.mxu0 %v728
    %985 = vmatpush1.bf16.msra.mxu0 %v727
    %986 = vmatprep.subr.bf16.mxu0 %v724
    %987 = vmatpush1.bf16.msra.mxu0 %v723
    %988 = vmatprep.subr.bf16.mxu0 %v720
    %989 = vmatpush1.bf16.msra.mxu0 %v719
    %990 = vmatprep.subr.bf16.mxu0 %v716
    %991 = vmatpush1.bf16.msra.mxu0 %v715
    %992 = vmatprep.subr.bf16.mxu0 %v712
    %993 = vmatpush1.bf16.msra.mxu0 %v711
    %994 = vmatprep.subr.bf16.mxu0 %v708
    %995 = vmatpush1.bf16.msra.mxu0 %v707
    %996 = vmatprep.subr.bf16.mxu0 %v704
    %997 = vmatpush1.bf16.msra.mxu0 %v703
    %998 = vmatprep.subr.bf16.mxu0 %v700
    %999 = vmatpush1.bf16.msra.mxu0 %v699
    %1000 = vmatprep.subr.bf16.mxu0 0
    %1001 = vmatpush2.bf16.msra.mxu0 0
    %1002 = vmatprep.subr.bf16.mxu0 0
    %1003 = vmatpush2.bf16.msra.mxu0 0
    %1004 = vmatprep.subr.bf16.mxu0 0
    %1005 = vmatpush2.bf16.msra.mxu0 0
    %1006 = vmatprep.subr.bf16.mxu0 0
    %1007 = vmatpush2.bf16.msra.mxu0 0
    %1008 = vmatprep.subr.bf16.mxu0 0
    %1009 = vmatpush2.bf16.msra.mxu0 0
    %1010 = vmatprep.subr.bf16.mxu0 0
    %1011 = vmatpush2.bf16.msra.mxu0 0
    %1012 = vmatprep.subr.bf16.mxu0 0
    %1013 = vmatpush2.bf16.msra.mxu0 0
    %1014 = vmatprep.subr.bf16.mxu0 0
    %1015 = vmatpush2.bf16.msra.mxu0 0
    %1016 = vmatprep.mubr.bf16.mxu0 0
    %1017 = vmatmul.mubr.bf16.gmra.mxu0 %v335
    %v1018 = vpop.f32.mrf.mxu0
    %v1019 = vadd.f32 %v966, %v1018
    %v1020 = vpop.f32.mrf.mxu0
    %v1021 = vadd.f32 %v968, %v1020
    %v1022 = vpop.f32.mrf.mxu0
    %v1023 = vadd.f32 %v970, %v1022
    %v1024 = vpop.f32.mrf.mxu0
    %v1025 = vadd.f32 %v972, %v1024
    %1026 = vmatprep.mubr.bf16.mxu0 0
    %1027 = vmatmul.mubr.bf16.gmra.mxu0 %v338
    %v1028 = vpop.f32.mrf.mxu0
    %v1029 = vadd.f32 %v976, %v1028
    %v1030 = vpop.f32.mrf.mxu0
    %v1031 = vadd.f32 %v978, %v1030
    %v1032 = vpop.f32.mrf.mxu0
    %v1033 = vadd.f32 %v980, %v1032
    %v1034 = vpop.f32.mrf.mxu0
    %v1035 = vadd.f32 %v982, %v1034
    %1036 = vdwg.mxu0
    %v1037 = vmul.f32 %v146, %v913
    %v1038 = vmul.f32 %v148, %v915
    %v1039 = vmul.f32 %v199, %v1019
    %v1040 = vmul.f32 %v201, %v1021
    %v1041 = vmul.f32 %v150, %v917
    %v1042 = vmul.f32 %v152, %v919
    %v1043 = vmul.f32 %v203, %v1023
    %v1044 = vmul.f32 %v205, %v1025
    %v1045 = vmul.f32 %v156, %v923
    %v1046 = vmul.f32 %v158, %v925
    %v1047 = vmul.f32 %v209, %v1029
    %v1048 = vmul.f32 %v211, %v1031
    %v1049 = vmul.f32 %v160, %v927
    %v1050 = vmul.f32 %v162, %v929
    %v1051 = vmul.f32 %v213, %v1033
    %v1052 = vmul.f32 %v215, %v1035
    %v1053 = vld [vmem:[%s5] sm:$0xff]
    %v1054 = vld [vmem:[%s5 + $0x8] sm:$0xff]
    %v1055 = vld [vmem:[%s5 + $0x10] sm:$0xff]
    %v1056 = vld [vmem:[%s5 + $0x18] sm:$0xff]
    %v1057 = vld [vmem:[%s5 + $0x20] sm:$0xff]
    %v1058 = vld [vmem:[%s5 + $0x28] sm:$0xff]
    %v1059 = vld [vmem:[%s5 + $0x30] sm:$0xff]
    %v1060 = vld [vmem:[%s5 + $0x38] sm:$0xff]
    %v1061 = vld [vmem:[%s5 + $0x40] sm:$0xff]
    %v1062 = vld [vmem:[%s5 + $0x48] sm:$0xff]
    %v1063 = vld [vmem:[%s5 + $0x50] sm:$0xff]
    %v1064 = vld [vmem:[%s5 + $0x58] sm:$0xff]
    %v1065 = vld [vmem:[%s5 + $0x60] sm:$0xff]
    %v1066 = vld [vmem:[%s5 + $0x68] sm:$0xff]
    %v1067 = vld [vmem:[%s5 + $0x70] sm:$0xff]
    %v1068 = vld [vmem:[%s5 + $0x78] sm:$0xff]
    %v1069 = vld [vmem:[%s5 + $0x80] sm:$0xff]
    %v1070 = vld [vmem:[%s5 + $0x88] sm:$0xff]
    %v1071 = vld [vmem:[%s5 + $0x90] sm:$0xff]
    %v1072 = vld [vmem:[%s5 + $0x98] sm:$0xff]
    %v1073 = vld [vmem:[%s5 + $0xa0] sm:$0xff]
    %v1074 = vld [vmem:[%s5 + $0xa8] sm:$0xff]
    %v1075 = vld [vmem:[%s5 + $0xb0] sm:$0xff]
    %v1076 = vld [vmem:[%s5 + $0xb8] sm:$0xff]
    %v1077 = vld [vmem:[%s5 + $0xc0] sm:$0xff]
    %v1078 = vld [vmem:[%s5 + $0xc8] sm:$0xff]
    %v1079 = vld [vmem:[%s5 + $0xd0] sm:$0xff]
    %v1080 = vld [vmem:[%s5 + $0xd8] sm:$0xff]
    %v1081 = vld [vmem:[%s5 + $0xe0] sm:$0xff]
    %v1082 = vld [vmem:[%s5 + $0xe8] sm:$0xff]
    %v1083 = vld [vmem:[%s5 + $0xf0] sm:$0xff]
    %v1084 = vld [vmem:[%s5 + $0xf8] sm:$0xff]
    %v1085 = vld [vmem:[%s5 + $0x100] sm:$0xff]
    %v1086 = vld [vmem:[%s5 + $0x108] sm:$0xff]
    %v1087 = vld [vmem:[%s5 + $0x110] sm:$0xff]
    %v1088 = vld [vmem:[%s5 + $0x118] sm:$0xff]
    %v1089 = vld [vmem:[%s5 + $0x120] sm:$0xff]
    %v1090 = vld [vmem:[%s5 + $0x128] sm:$0xff]
    %v1091 = vld [vmem:[%s5 + $0x130] sm:$0xff]
    %v1092 = vld [vmem:[%s5 + $0x138] sm:$0xff]
    %v1093 = vld [vmem:[%s5 + $0x140] sm:$0xff]
    %v1094 = vld [vmem:[%s5 + $0x148] sm:$0xff]
    %v1095 = vld [vmem:[%s5 + $0x150] sm:$0xff]
    %v1096 = vld [vmem:[%s5 + $0x158] sm:$0xff]
    %v1097 = vld [vmem:[%s5 + $0x160] sm:$0xff]
    %v1098 = vld [vmem:[%s5 + $0x168] sm:$0xff]
    %v1099 = vld [vmem:[%s5 + $0x170] sm:$0xff]
    %v1100 = vld [vmem:[%s5 + $0x178] sm:$0xff]
    %v1101 = vld [vmem:[%s5 + $0x180] sm:$0xff]
    %v1102 = vld [vmem:[%s5 + $0x188] sm:$0xff]
    %v1103 = vld [vmem:[%s5 + $0x190] sm:$0xff]
    %v1104 = vld [vmem:[%s5 + $0x198] sm:$0xff]
    %v1105 = vld [vmem:[%s5 + $0x1a0] sm:$0xff]
    %v1106 = vld [vmem:[%s5 + $0x1a8] sm:$0xff]
    %v1107 = vld [vmem:[%s5 + $0x1b0] sm:$0xff]
    %v1108 = vld [vmem:[%s5 + $0x1b8] sm:$0xff]
    %v1109 = vld [vmem:[%s5 + $0x1c0] sm:$0xff]
    %v1110 = vld [vmem:[%s5 + $0x1c8] sm:$0xff]
    %v1111 = vld [vmem:[%s5 + $0x1d0] sm:$0xff]
    %v1112 = vld [vmem:[%s5 + $0x1d8] sm:$0xff]
    %v1113 = vld [vmem:[%s5 + $0x1e0] sm:$0xff]
    %v1114 = vld [vmem:[%s5 + $0x1e8] sm:$0xff]
    %v1115 = vld [vmem:[%s5 + $0x1f0] sm:$0xff]
    %v1116 = vld [vmem:[%s5 + $0x1f8] sm:$0xff]
    %1117 = vmatprep.subr.mxu0 0.0
    %1118 = vmatpush1.msra.mxu0 %v1068
    %1119 = vmatprep.subr.mxu0 0.0
    %1120 = vmatpush1.msra.mxu0 %v1067
    %1121 = vmatprep.subr.mxu0 0.0
    %1122 = vmatpush1.msra.mxu0 %v1066
    %1123 = vmatprep.subr.mxu0 0.0
    %1124 = vmatpush1.msra.mxu0 %v1065
    %1125 = vmatprep.subr.mxu0 0.0
    %1126 = vmatpush1.msra.mxu0 %v1064
    %1127 = vmatprep.subr.mxu0 0.0
    %1128 = vmatpush1.msra.mxu0 %v1063
    %1129 = vmatprep.subr.mxu0 0.0
    %1130 = vmatpush1.msra.mxu0 %v1062
    %1131 = vmatprep.subr.mxu0 0.0
    %1132 = vmatpush1.msra.mxu0 %v1061
    %1133 = vmatprep.subr.mxu0 0.0
    %1134 = vmatpush1.msra.mxu0 %v1060
    %1135 = vmatprep.subr.mxu0 0.0
    %1136 = vmatpush1.msra.mxu0 %v1059
    %1137 = vmatprep.subr.mxu0 0.0
    %1138 = vmatpush1.msra.mxu0 %v1058
    %1139 = vmatprep.subr.mxu0 0.0
    %1140 = vmatpush1.msra.mxu0 %v1057
    %1141 = vmatprep.subr.mxu0 0.0
    %1142 = vmatpush1.msra.mxu0 %v1056
    %1143 = vmatprep.subr.mxu0 0.0
    %1144 = vmatpush1.msra.mxu0 %v1055
    %1145 = vmatprep.subr.mxu0 0.0
    %1146 = vmatpush1.msra.mxu0 %v1054
    %1147 = vmatprep.subr.mxu0 0.0
    %1148 = vmatpush1.msra.mxu0 %v1053
    %1149 = vmatprep.subr.mxu0 0.0
    %1150 = vmatpush2.msra.mxu0 %v1084
    %1151 = vmatprep.subr.mxu0 0.0
    %1152 = vmatpush2.msra.mxu0 %v1083
    %1153 = vmatprep.subr.mxu0 0.0
    %1154 = vmatpush2.msra.mxu0 %v1082
    %1155 = vmatprep.subr.mxu0 0.0
    %1156 = vmatpush2.msra.mxu0 %v1081
    %1157 = vmatprep.subr.mxu0 0.0
    %1158 = vmatpush2.msra.mxu0 %v1080
    %1159 = vmatprep.subr.mxu0 0.0
    %1160 = vmatpush2.msra.mxu0 %v1079
    %1161 = vmatprep.subr.mxu0 0.0
    %1162 = vmatpush2.msra.mxu0 %v1078
    %1163 = vmatprep.subr.mxu0 0.0
    %1164 = vmatpush2.msra.mxu0 %v1077
    %1165 = vmatprep.subr.mxu0 0.0
    %1166 = vmatpush2.msra.mxu0 %v1076
    %1167 = vmatprep.subr.mxu0 0.0
    %1168 = vmatpush2.msra.mxu0 %v1075
    %1169 = vmatprep.subr.mxu0 0.0
    %1170 = vmatpush2.msra.mxu0 %v1074
    %1171 = vmatprep.subr.mxu0 0.0
    %1172 = vmatpush2.msra.mxu0 %v1073
    %1173 = vmatprep.subr.mxu0 0.0
    %1174 = vmatpush2.msra.mxu0 %v1072
    %1175 = vmatprep.subr.mxu0 0.0
    %1176 = vmatpush2.msra.mxu0 %v1071
    %1177 = vmatprep.subr.mxu0 0.0
    %1178 = vmatpush2.msra.mxu0 %v1070
    %1179 = vmatprep.subr.mxu0 0.0
    %1180 = vmatpush2.msra.mxu0 %v1069
    %1181 = vmatprep.mubr.f32.mxu0 %v1038
    %1182 = vmatmul.mubr.f32.gmra.mxu0 %v1037
    %v1183 = vpop.f32.mrf.mxu0
    %v1184 = vadd.f32 0.0, %v1183
    %v1185 = vpop.f32.mrf.mxu0
    %1186 = vmatprep.mubr.f32.mxu0 %v1042
    %1187 = vmatmul.mubr.f32.gmra.mxu0 %v1041
    %v1188 = vpop.f32.mrf.mxu0
    %v1189 = vadd.f32 0.0, %v1188
    %v1190 = vpop.f32.mrf.mxu0
    %1191 = vmatprep.mubr.f32.mxu0 %v1046
    %1192 = vmatmul.mubr.f32.gmra.mxu0 %v1045
    %v1193 = vpop.f32.mrf.mxu0
    %v1194 = vadd.f32 0.0, %v1193
    %v1195 = vpop.f32.mrf.mxu0
    %1196 = vmatprep.mubr.f32.mxu0 %v1050
    %1197 = vmatmul.mubr.f32.gmra.mxu0 %v1049
    %v1198 = vpop.f32.mrf.mxu0
    %v1199 = vadd.f32 0.0, %v1198
    %v1200 = vpop.f32.mrf.mxu0
    %1201 = vdwg.mxu0
    %1202 = vmatprep.subr.mxu0 0.0
    %1203 = vmatpush1.msra.mxu0 %v1100
    %1204 = vmatprep.subr.mxu0 0.0
    %1205 = vmatpush1.msra.mxu0 %v1099
    %1206 = vmatprep.subr.mxu0 0.0
    %1207 = vmatpush1.msra.mxu0 %v1098
    %1208 = vmatprep.subr.mxu0 0.0
    %1209 = vmatpush1.msra.mxu0 %v1097
    %1210 = vmatprep.subr.mxu0 0.0
    %1211 = vmatpush1.msra.mxu0 %v1096
    %1212 = vmatprep.subr.mxu0 0.0
    %1213 = vmatpush1.msra.mxu0 %v1095
    %1214 = vmatprep.subr.mxu0 0.0
    %1215 = vmatpush1.msra.mxu0 %v1094
    %1216 = vmatprep.subr.mxu0 0.0
    %1217 = vmatpush1.msra.mxu0 %v1093
    %1218 = vmatprep.subr.mxu0 0.0
    %1219 = vmatpush1.msra.mxu0 %v1092
    %1220 = vmatprep.subr.mxu0 0.0
    %1221 = vmatpush1.msra.mxu0 %v1091
    %1222 = vmatprep.subr.mxu0 0.0
    %1223 = vmatpush1.msra.mxu0 %v1090
    %1224 = vmatprep.subr.mxu0 0.0
    %1225 = vmatpush1.msra.mxu0 %v1089
    %1226 = vmatprep.subr.mxu0 0.0
    %1227 = vmatpush1.msra.mxu0 %v1088
    %1228 = vmatprep.subr.mxu0 0.0
    %1229 = vmatpush1.msra.mxu0 %v1087
    %1230 = vmatprep.subr.mxu0 0.0
    %1231 = vmatpush1.msra.mxu0 %v1086
    %1232 = vmatprep.subr.mxu0 0.0
    %1233 = vmatpush1.msra.mxu0 %v1085
    %1234 = vmatprep.subr.mxu0 0.0
    %1235 = vmatpush2.msra.mxu0 %v1116
    %1236 = vmatprep.subr.mxu0 0.0
    %1237 = vmatpush2.msra.mxu0 %v1115
    %1238 = vmatprep.subr.mxu0 0.0
    %1239 = vmatpush2.msra.mxu0 %v1114
    %1240 = vmatprep.subr.mxu0 0.0
    %1241 = vmatpush2.msra.mxu0 %v1113
    %1242 = vmatprep.subr.mxu0 0.0
    %1243 = vmatpush2.msra.mxu0 %v1112
    %1244 = vmatprep.subr.mxu0 0.0
    %1245 = vmatpush2.msra.mxu0 %v1111
    %1246 = vmatprep.subr.mxu0 0.0
    %1247 = vmatpush2.msra.mxu0 %v1110
    %1248 = vmatprep.subr.mxu0 0.0
    %1249 = vmatpush2.msra.mxu0 %v1109
    %1250 = vmatprep.subr.mxu0 0.0
    %1251 = vmatpush2.msra.mxu0 %v1108
    %1252 = vmatprep.subr.mxu0 0.0
    %1253 = vmatpush2.msra.mxu0 %v1107
    %1254 = vmatprep.subr.mxu0 0.0
    %1255 = vmatpush2.msra.mxu0 %v1106
    %1256 = vmatprep.subr.mxu0 0.0
    %1257 = vmatpush2.msra.mxu0 %v1105
    %1258 = vmatprep.subr.mxu0 0.0
    %1259 = vmatpush2.msra.mxu0 %v1104
    %1260 = vmatprep.subr.mxu0 0.0
    %1261 = vmatpush2.msra.mxu0 %v1103
    %1262 = vmatprep.subr.mxu0 0.0
    %1263 = vmatpush2.msra.mxu0 %v1102
    %1264 = vmatprep.subr.mxu0 0.0
    %1265 = vmatpush2.msra.mxu0 %v1101
    %1266 = vmatprep.mubr.f32.mxu0 %v1040
    %1267 = vmatmul.mubr.f32.gmra.mxu0 %v1039
    %v1268 = vpop.f32.mrf.mxu0
    %v1269 = vadd.f32 %v1184, %v1268
    %v1270 = vpop.f32.mrf.mxu0
    %1271 = vmatprep.mubr.f32.mxu0 %v1044
    %1272 = vmatmul.mubr.f32.gmra.mxu0 %v1043
    %v1273 = vpop.f32.mrf.mxu0
    %v1274 = vadd.f32 %v1189, %v1273
    %v1275 = vpop.f32.mrf.mxu0
    %1276 = vmatprep.mubr.f32.mxu0 %v1048
    %1277 = vmatmul.mubr.f32.gmra.mxu0 %v1047
    %v1278 = vpop.f32.mrf.mxu0
    %v1279 = vadd.f32 %v1194, %v1278
    %v1280 = vpop.f32.mrf.mxu0
    %1281 = vmatprep.mubr.f32.mxu0 %v1052
    %1282 = vmatmul.mubr.f32.gmra.mxu0 %v1051
    %v1283 = vpop.f32.mrf.mxu0
    %v1284 = vadd.f32 %v1199, %v1283
    %v1285 = vpop.f32.mrf.mxu0
    %1286 = vdwg.mxu0
    %v1287 = vld [vmem:[%s2] sm:$0xff]
    %v1288 = vld [vmem:[%s2 + $0x8] sm:$0xff]
    %v1289 = vld [vmem:[%s2 + $0x10] sm:$0xff]
    %v1290 = vld [vmem:[%s2 + $0x18] sm:$0xff]
    %vm1291 = vcmp.gt.f32.partialorder %v1287, 0.0
    %vm1292 = vcmp.gt.f32.partialorder %v1288, 0.0
    %vm1293 = vcmp.gt.f32.partialorder %v1289, 0.0
    %vm1294 = vcmp.gt.f32.partialorder %v1290, 0.0
    %v1295 = vsel %vm1291, %v1269, -3.4028235e+38
    %v1296 = vsel %vm1292, %v1274, -3.4028235e+38
    %v1297 = vsel %vm1293, %v1279, -3.4028235e+38
    %v1298 = vsel %vm1294, %v1284, -3.4028235e+38
    %v1299 = vsel %vm104, %v1295, -inf
    %1300 = vmax.xlane.f32.xlu0 %v1299
    %v1301 = vpop.xlane.xlu0 %1300
    %v1302 = vsel %vm104, %v1296, -inf
    %1303 = vmax.xlane.f32.xlu0 %v1302
    %v1304 = vpop.xlane.xlu0 %1303
    %v1305 = vsel %vm104, %v1297, -inf
    %1306 = vmax.xlane.f32.xlu0 %v1305
    %v1307 = vpop.xlane.xlu0 %1306
    %v1308 = vsel %vm104, %v1298, -inf
    %1309 = vmax.xlane.f32.xlu0 %v1308
    %v1310 = vpop.xlane.xlu0 %1309
    %v1311 = vsub.f32 %v1295, %v1301
    %v1312 = vsub.f32 %v1296, %v1304
    %v1313 = vsub.f32 %v1297, %v1307
    %v1314 = vsub.f32 %v1298, %v1310
    %v1315 = vmul.f32 %v1311, 1.442695
    %v1316 = vpow.pop %v1315
    %v1317 = vmul.f32 %v1312, 1.442695
    %v1318 = vpow.pop %v1317
    %v1319 = vmul.f32 %v1313, 1.442695
    %v1320 = vpow.pop %v1319
    %v1321 = vmul.f32 %v1314, 1.442695
    %v1322 = vpow.pop %v1321
    %v1323 = vld [vmem:[%s6] sm:$0xff]
    %v1324 = vld [vmem:[%s6 + $0x8] sm:$0xff]
    %v1325 = vld [vmem:[%s6 + $0x10] sm:$0xff]
    %v1326 = vld [vmem:[%s6 + $0x18] sm:$0xff]
    %v1328 = vsel %vm104, %v1316, 0
    %v1331 = vsel %vm104, %v1318, 0
    %v1334 = vsel %vm104, %v1320, 0
    %v1337 = vsel %vm104, %v1322, 0
    %1339 = vmatprep.subr.mxu0 0.0
    %1340 = vmatpush1.msra.mxu0 0.0
    %1341 = vmatprep.subr.mxu0 0.0
    %1342 = vmatpush1.msra.mxu0 0.0
    %1343 = vmatprep.subr.mxu0 0.0
    %1344 = vmatpush1.msra.mxu0 0.0
    %1345 = vmatprep.subr.mxu0 0.0
    %1346 = vmatpush1.msra.mxu0 0.0
    %1347 = vmatprep.subr.mxu0 0.0
    %1348 = vmatpush1.msra.mxu0 0.0
    %1349 = vmatprep.subr.mxu0 0.0
    %1350 = vmatpush1.msra.mxu0 0.0
    %1351 = vmatprep.subr.mxu0 0.0
    %1352 = vmatpush1.msra.mxu0 0.0
    %1353 = vmatprep.subr.mxu0 0.0
    %1354 = vmatpush1.msra.mxu0 0.0
    %1355 = vmatprep.subr.mxu0 0.0
    %1356 = vmatpush1.msra.mxu0 0.0
    %1357 = vmatprep.subr.mxu0 0.0
    %1358 = vmatpush1.msra.mxu0 0.0
    %1359 = vmatprep.subr.mxu0 0.0
    %1360 = vmatpush1.msra.mxu0 0.0
    %1361 = vmatprep.subr.mxu0 0.0
    %1362 = vmatpush1.msra.mxu0 0.0
    %1363 = vmatprep.subr.mxu0 0.0
    %1364 = vmatpush1.msra.mxu0 %v1326
    %1365 = vmatprep.subr.mxu0 0.0
    %1366 = vmatpush1.msra.mxu0 %v1325
    %1367 = vmatprep.subr.mxu0 0.0
    %1368 = vmatpush1.msra.mxu0 %v1324
    %1369 = vmatprep.subr.mxu0 0.0
    %1370 = vmatpush1.msra.mxu0 %v1323
    %1371 = vmatprep.subr.mxu0 0.0
    %1372 = vmatpush2.msra.mxu0 0.0
    %1373 = vmatprep.subr.mxu0 0.0
    %1374 = vmatpush2.msra.mxu0 0.0
    %1375 = vmatprep.subr.mxu0 0.0
    %1376 = vmatpush2.msra.mxu0 0.0
    %1377 = vmatprep.subr.mxu0 0.0
    %1378 = vmatpush2.msra.mxu0 0.0
    %1379 = vmatprep.subr.mxu0 0.0
    %1380 = vmatpush2.msra.mxu0 0.0
    %1381 = vmatprep.subr.mxu0 0.0
    %1382 = vmatpush2.msra.mxu0 0.0
    %1383 = vmatprep.subr.mxu0 0.0
    %1384 = vmatpush2.msra.mxu0 0.0
    %1385 = vmatprep.subr.mxu0 0.0
    %1386 = vmatpush2.msra.mxu0 0.0
    %1387 = vmatprep.subr.mxu0 0.0
    %1388 = vmatpush2.msra.mxu0 0.0
    %1389 = vmatprep.subr.mxu0 0.0
    %1390 = vmatpush2.msra.mxu0 0.0
    %1391 = vmatprep.subr.mxu0 0.0
    %1392 = vmatpush2.msra.mxu0 0.0
    %1393 = vmatprep.subr.mxu0 0.0
    %1394 = vmatpush2.msra.mxu0 0.0
    %1395 = vmatprep.subr.mxu0 0.0
    %1396 = vmatpush2.msra.mxu0 0.0
    %1397 = vmatprep.subr.mxu0 0.0
    %1398 = vmatpush2.msra.mxu0 0.0
    %1399 = vmatprep.subr.mxu0 0.0
    %1400 = vmatpush2.msra.mxu0 0.0
    %1401 = vmatprep.subr.mxu0 0.0
    %1402 = vmatpush2.msra.mxu0 0.0
    %1403 = vmatprep.mubr.f32.mxu0 0.0
    %1404 = vmatmul.mubr.f32.gmra.mxu0 %v1328
    %v1405 = vpop.f32.mrf.mxu0
    %v1406 = vadd.f32 1e-30, %v1405
    %v1407 = vpop.f32.mrf.mxu0
    %1408 = vmatprep.mubr.f32.mxu0 0.0
    %1409 = vmatmul.mubr.f32.gmra.mxu0 %v1331
    %v1410 = vpop.f32.mrf.mxu0
    %v1411 = vadd.f32 1e-30, %v1410
    %v1412 = vpop.f32.mrf.mxu0
    %1413 = vmatprep.mubr.f32.mxu0 0.0
    %1414 = vmatmul.mubr.f32.gmra.mxu0 %v1334
    %v1415 = vpop.f32.mrf.mxu0
    %v1416 = vadd.f32 1e-30, %v1415
    %v1417 = vpop.f32.mrf.mxu0
    %1418 = vmatprep.mubr.f32.mxu0 0.0
    %1419 = vmatmul.mubr.f32.gmra.mxu0 %v1337
    %v1420 = vpop.f32.mrf.mxu0
    %v1421 = vadd.f32 1e-30, %v1420
    %v1422 = vpop.f32.mrf.mxu0
    %1423 = vdwg.mxu0
    %v1424 = vrcp.pop %v1406
    %v1425 = vrcp.pop %v1411
    %v1426 = vrcp.pop %v1416
    %v1427 = vrcp.pop %v1421
    %v1428 = vmul.f32 %v1316, %v1424
    %v1429 = vmul.f32 %v1318, %v1425
    %v1430 = vmul.f32 %v1320, %v1426
    %v1431 = vmul.f32 %v1322, %v1427
    %v1432 = vmul.f32 %v1428, %v1287
    %v1433 = vmul.f32 %v1429, %v1288
    %v1434 = vmul.f32 %v1430, %v1289
    %v1435 = vmul.f32 %v1431, %v1290
    %v1436 = vld [vmem:[%s7] sm:$0xff]
    %v1437 = vld [vmem:[%s7 + $0x8] sm:$0xff]
    %v1438 = vld [vmem:[%s7 + $0x10] sm:$0xff]
    %v1439 = vld [vmem:[%s7 + $0x18] sm:$0xff]
    %v1440 = vld [vmem:[%s7 + $0x20] sm:$0xff]
    %v1441 = vld [vmem:[%s7 + $0x28] sm:$0xff]
    %v1442 = vld [vmem:[%s7 + $0x30] sm:$0xff]
    %v1443 = vld [vmem:[%s7 + $0x38] sm:$0xff]
    %v1444 = vld [vmem:[%s7 + $0x40] sm:$0xff]
    %v1445 = vld [vmem:[%s7 + $0x48] sm:$0xff]
    %v1446 = vld [vmem:[%s7 + $0x50] sm:$0xff]
    %v1447 = vld [vmem:[%s7 + $0x58] sm:$0xff]
    %v1448 = vld [vmem:[%s7 + $0x60] sm:$0xff]
    %v1449 = vld [vmem:[%s7 + $0x68] sm:$0xff]
    %v1450 = vld [vmem:[%s7 + $0x70] sm:$0xff]
    %v1451 = vld [vmem:[%s7 + $0x78] sm:$0xff]
    %v1453 = vsel %vm104, %v1432, 0
    %v1456 = vsel %vm104, %v1433, 0
    %v1459 = vsel %vm104, %v1434, 0
    %v1462 = vsel %vm104, %v1435, 0
    %1464 = vmatprep.subr.mxu0 0.0
    %1465 = vmatpush1.msra.mxu0 0.0
    %1466 = vmatprep.subr.mxu0 0.0
    %1467 = vmatpush1.msra.mxu0 0.0
    %1468 = vmatprep.subr.mxu0 0.0
    %1469 = vmatpush1.msra.mxu0 0.0
    %1470 = vmatprep.subr.mxu0 0.0
    %1471 = vmatpush1.msra.mxu0 0.0
    %1472 = vmatprep.subr.mxu0 0.0
    %1473 = vmatpush1.msra.mxu0 0.0
    %1474 = vmatprep.subr.mxu0 0.0
    %1475 = vmatpush1.msra.mxu0 0.0
    %1476 = vmatprep.subr.mxu0 0.0
    %1477 = vmatpush1.msra.mxu0 0.0
    %1478 = vmatprep.subr.mxu0 0.0
    %1479 = vmatpush1.msra.mxu0 0.0
    %1480 = vmatprep.subr.mxu0 0.0
    %1481 = vmatpush1.msra.mxu0 0.0
    %1482 = vmatprep.subr.mxu0 0.0
    %1483 = vmatpush1.msra.mxu0 0.0
    %1484 = vmatprep.subr.mxu0 0.0
    %1485 = vmatpush1.msra.mxu0 0.0
    %1486 = vmatprep.subr.mxu0 0.0
    %1487 = vmatpush1.msra.mxu0 0.0
    %1488 = vmatprep.subr.mxu0 %v1449
    %1489 = vmatpush1.msra.mxu0 %v1448
    %1490 = vmatprep.subr.mxu0 %v1445
    %1491 = vmatpush1.msra.mxu0 %v1444
    %1492 = vmatprep.subr.mxu0 %v1441
    %1493 = vmatpush1.msra.mxu0 %v1440
    %1494 = vmatprep.subr.mxu0 %v1437
    %1495 = vmatpush1.msra.mxu0 %v1436
    %1496 = vmatprep.subr.mxu0 0.0
    %1497 = vmatpush2.msra.mxu0 0.0
    %1498 = vmatprep.subr.mxu0 0.0
    %1499 = vmatpush2.msra.mxu0 0.0
    %1500 = vmatprep.subr.mxu0 0.0
    %1501 = vmatpush2.msra.mxu0 0.0
    %1502 = vmatprep.subr.mxu0 0.0
    %1503 = vmatpush2.msra.mxu0 0.0
    %1504 = vmatprep.subr.mxu0 0.0
    %1505 = vmatpush2.msra.mxu0 0.0
    %1506 = vmatprep.subr.mxu0 0.0
    %1507 = vmatpush2.msra.mxu0 0.0
    %1508 = vmatprep.subr.mxu0 0.0
    %1509 = vmatpush2.msra.mxu0 0.0
    %1510 = vmatprep.subr.mxu0 0.0
    %1511 = vmatpush2.msra.mxu0 0.0
    %1512 = vmatprep.subr.mxu0 0.0
    %1513 = vmatpush2.msra.mxu0 0.0
    %1514 = vmatprep.subr.mxu0 0.0
    %1515 = vmatpush2.msra.mxu0 0.0
    %1516 = vmatprep.subr.mxu0 0.0
    %1517 = vmatpush2.msra.mxu0 0.0
    %1518 = vmatprep.subr.mxu0 0.0
    %1519 = vmatpush2.msra.mxu0 0.0
    %1520 = vmatprep.subr.mxu0 0.0
    %1521 = vmatpush2.msra.mxu0 0.0
    %1522 = vmatprep.subr.mxu0 0.0
    %1523 = vmatpush2.msra.mxu0 0.0
    %1524 = vmatprep.subr.mxu0 0.0
    %1525 = vmatpush2.msra.mxu0 0.0
    %1526 = vmatprep.subr.mxu0 0.0
    %1527 = vmatpush2.msra.mxu0 0.0
    %1528 = vmatprep.mubr.f32.mxu0 0.0
    %1529 = vmatmul.mubr.f32.gmra.mxu0 %v1453
    %v1530 = vpop.f32.mrf.mxu0
    %v1531 = vadd.f32 0.0, %v1530
    %v1532 = vpop.f32.mrf.mxu0
    %v1533 = vadd.f32 0.0, %v1532
    %1534 = vmatprep.mubr.f32.mxu0 0.0
    %1535 = vmatmul.mubr.f32.gmra.mxu0 %v1456
    %v1536 = vpop.f32.mrf.mxu0
    %v1537 = vadd.f32 0.0, %v1536
    %v1538 = vpop.f32.mrf.mxu0
    %v1539 = vadd.f32 0.0, %v1538
    %1540 = vmatprep.mubr.f32.mxu0 0.0
    %1541 = vmatmul.mubr.f32.gmra.mxu0 %v1459
    %v1542 = vpop.f32.mrf.mxu0
    %v1543 = vadd.f32 0.0, %v1542
    %v1544 = vpop.f32.mrf.mxu0
    %v1545 = vadd.f32 0.0, %v1544
    %1546 = vmatprep.mubr.f32.mxu0 0.0
    %1547 = vmatmul.mubr.f32.gmra.mxu0 %v1462
    %v1548 = vpop.f32.mrf.mxu0
    %v1549 = vadd.f32 0.0, %v1548
    %v1550 = vpop.f32.mrf.mxu0
    %v1551 = vadd.f32 0.0, %v1550
    %1552 = vdwg.mxu0
    %1553 = vmatprep.subr.mxu0 0.0
    %1554 = vmatpush1.msra.mxu0 0.0
    %1555 = vmatprep.subr.mxu0 0.0
    %1556 = vmatpush1.msra.mxu0 0.0
    %1557 = vmatprep.subr.mxu0 0.0
    %1558 = vmatpush1.msra.mxu0 0.0
    %1559 = vmatprep.subr.mxu0 0.0
    %1560 = vmatpush1.msra.mxu0 0.0
    %1561 = vmatprep.subr.mxu0 0.0
    %1562 = vmatpush1.msra.mxu0 0.0
    %1563 = vmatprep.subr.mxu0 0.0
    %1564 = vmatpush1.msra.mxu0 0.0
    %1565 = vmatprep.subr.mxu0 0.0
    %1566 = vmatpush1.msra.mxu0 0.0
    %1567 = vmatprep.subr.mxu0 0.0
    %1568 = vmatpush1.msra.mxu0 0.0
    %1569 = vmatprep.subr.mxu0 0.0
    %1570 = vmatpush1.msra.mxu0 0.0
    %1571 = vmatprep.subr.mxu0 0.0
    %1572 = vmatpush1.msra.mxu0 0.0
    %1573 = vmatprep.subr.mxu0 0.0
    %1574 = vmatpush1.msra.mxu0 0.0
    %1575 = vmatprep.subr.mxu0 0.0
    %1576 = vmatpush1.msra.mxu0 0.0
    %1577 = vmatprep.subr.mxu0 %v1451
    %1578 = vmatpush1.msra.mxu0 %v1450
    %1579 = vmatprep.subr.mxu0 %v1447
    %1580 = vmatpush1.msra.mxu0 %v1446
    %1581 = vmatprep.subr.mxu0 %v1443
    %1582 = vmatpush1.msra.mxu0 %v1442
    %1583 = vmatprep.subr.mxu0 %v1439
    %1584 = vmatpush1.msra.mxu0 %v1438
    %1585 = vmatprep.subr.mxu0 0.0
    %1586 = vmatpush2.msra.mxu0 0.0
    %1587 = vmatprep.subr.mxu0 0.0
    %1588 = vmatpush2.msra.mxu0 0.0
    %1589 = vmatprep.subr.mxu0 0.0
    %1590 = vmatpush2.msra.mxu0 0.0
    %1591 = vmatprep.subr.mxu0 0.0
    %1592 = vmatpush2.msra.mxu0 0.0
    %1593 = vmatprep.subr.mxu0 0.0
    %1594 = vmatpush2.msra.mxu0 0.0
    %1595 = vmatprep.subr.mxu0 0.0
    %1596 = vmatpush2.msra.mxu0 0.0
    %1597 = vmatprep.subr.mxu0 0.0
    %1598 = vmatpush2.msra.mxu0 0.0
    %1599 = vmatprep.subr.mxu0 0.0
    %1600 = vmatpush2.msra.mxu0 0.0
    %1601 = vmatprep.subr.mxu0 0.0
    %1602 = vmatpush2.msra.mxu0 0.0
    %1603 = vmatprep.subr.mxu0 0.0
    %1604 = vmatpush2.msra.mxu0 0.0
    %1605 = vmatprep.subr.mxu0 0.0
    %1606 = vmatpush2.msra.mxu0 0.0
    %1607 = vmatprep.subr.mxu0 0.0
    %1608 = vmatpush2.msra.mxu0 0.0
    %1609 = vmatprep.subr.mxu0 0.0
    %1610 = vmatpush2.msra.mxu0 0.0
    %1611 = vmatprep.subr.mxu0 0.0
    %1612 = vmatpush2.msra.mxu0 0.0
    %1613 = vmatprep.subr.mxu0 0.0
    %1614 = vmatpush2.msra.mxu0 0.0
    %1615 = vmatprep.subr.mxu0 0.0
    %1616 = vmatpush2.msra.mxu0 0.0
    %1617 = vmatprep.mubr.f32.mxu0 0.0
    %1618 = vmatmul.mubr.f32.gmra.mxu0 %v1453
    %v1619 = vpop.f32.mrf.mxu0
    %v1620 = vadd.f32 0.0, %v1619
    %v1621 = vpop.f32.mrf.mxu0
    %v1622 = vadd.f32 0.0, %v1621
    %1623 = vmatprep.mubr.f32.mxu0 0.0
    %1624 = vmatmul.mubr.f32.gmra.mxu0 %v1456
    %v1625 = vpop.f32.mrf.mxu0
    %v1626 = vadd.f32 0.0, %v1625
    %v1627 = vpop.f32.mrf.mxu0
    %v1628 = vadd.f32 0.0, %v1627
    %1629 = vmatprep.mubr.f32.mxu0 0.0
    %1630 = vmatmul.mubr.f32.gmra.mxu0 %v1459
    %v1631 = vpop.f32.mrf.mxu0
    %v1632 = vadd.f32 0.0, %v1631
    %v1633 = vpop.f32.mrf.mxu0
    %v1634 = vadd.f32 0.0, %v1633
    %1635 = vmatprep.mubr.f32.mxu0 0.0
    %1636 = vmatmul.mubr.f32.gmra.mxu0 %v1462
    %v1637 = vpop.f32.mrf.mxu0
    %v1638 = vadd.f32 0.0, %v1637
    %v1639 = vpop.f32.mrf.mxu0
    %v1640 = vadd.f32 0.0, %v1639
    %1641 = vdwg.mxu0
    %v1642 = vmul.f32 %v1531, %v913
    %v1643 = vmul.f32 %v1533, %v915
    %v1644 = vmul.f32 %v1620, %v1019
    %v1645 = vmul.f32 %v1622, %v1021
    %v1646 = vmul.f32 %v1537, %v917
    %v1647 = vmul.f32 %v1539, %v919
    %v1648 = vmul.f32 %v1626, %v1023
    %v1649 = vmul.f32 %v1628, %v1025
    %v1650 = vmul.f32 %v1543, %v923
    %v1651 = vmul.f32 %v1545, %v925
    %v1652 = vmul.f32 %v1632, %v1029
    %v1653 = vmul.f32 %v1634, %v1031
    %v1654 = vmul.f32 %v1549, %v927
    %v1655 = vmul.f32 %v1551, %v929
    %v1656 = vmul.f32 %v1638, %v1033
    %v1657 = vmul.f32 %v1640, %v1035
    %v1658 = vld [vmem:[%s8] sm:$0xff]
    %v1659 = vld [vmem:[%s8 + $0x8] sm:$0xff]
    %v1660 = vld [vmem:[%s8 + $0x10] sm:$0xff]
    %v1661 = vld [vmem:[%s8 + $0x18] sm:$0xff]
    %v1662 = vld [vmem:[%s8 + $0x20] sm:$0xff]
    %v1663 = vld [vmem:[%s8 + $0x28] sm:$0xff]
    %v1664 = vld [vmem:[%s8 + $0x30] sm:$0xff]
    %v1665 = vld [vmem:[%s8 + $0x38] sm:$0xff]
    %v1666 = vld [vmem:[%s8 + $0x40] sm:$0xff]
    %v1667 = vld [vmem:[%s8 + $0x48] sm:$0xff]
    %v1668 = vld [vmem:[%s8 + $0x50] sm:$0xff]
    %v1669 = vld [vmem:[%s8 + $0x58] sm:$0xff]
    %v1670 = vld [vmem:[%s8 + $0x60] sm:$0xff]
    %v1671 = vld [vmem:[%s8 + $0x68] sm:$0xff]
    %v1672 = vld [vmem:[%s8 + $0x70] sm:$0xff]
    %v1673 = vld [vmem:[%s8 + $0x78] sm:$0xff]
    %v1674 = vld [vmem:[%s8 + $0x80] sm:$0xff]
    %v1675 = vld [vmem:[%s8 + $0x88] sm:$0xff]
    %v1676 = vld [vmem:[%s8 + $0x90] sm:$0xff]
    %v1677 = vld [vmem:[%s8 + $0x98] sm:$0xff]
    %v1678 = vld [vmem:[%s8 + $0xa0] sm:$0xff]
    %v1679 = vld [vmem:[%s8 + $0xa8] sm:$0xff]
    %v1680 = vld [vmem:[%s8 + $0xb0] sm:$0xff]
    %v1681 = vld [vmem:[%s8 + $0xb8] sm:$0xff]
    %v1682 = vld [vmem:[%s8 + $0xc0] sm:$0xff]
    %v1683 = vld [vmem:[%s8 + $0xc8] sm:$0xff]
    %v1684 = vld [vmem:[%s8 + $0xd0] sm:$0xff]
    %v1685 = vld [vmem:[%s8 + $0xd8] sm:$0xff]
    %v1686 = vld [vmem:[%s8 + $0xe0] sm:$0xff]
    %v1687 = vld [vmem:[%s8 + $0xe8] sm:$0xff]
    %v1688 = vld [vmem:[%s8 + $0xf0] sm:$0xff]
    %v1689 = vld [vmem:[%s8 + $0xf8] sm:$0xff]
    %v1690 = vld [vmem:[%s8 + $0x100] sm:$0xff]
    %v1691 = vld [vmem:[%s8 + $0x108] sm:$0xff]
    %v1692 = vld [vmem:[%s8 + $0x110] sm:$0xff]
    %v1693 = vld [vmem:[%s8 + $0x118] sm:$0xff]
    %v1694 = vld [vmem:[%s8 + $0x120] sm:$0xff]
    %v1695 = vld [vmem:[%s8 + $0x128] sm:$0xff]
    %v1696 = vld [vmem:[%s8 + $0x130] sm:$0xff]
    %v1697 = vld [vmem:[%s8 + $0x138] sm:$0xff]
    %v1698 = vld [vmem:[%s8 + $0x140] sm:$0xff]
    %v1699 = vld [vmem:[%s8 + $0x148] sm:$0xff]
    %v1700 = vld [vmem:[%s8 + $0x150] sm:$0xff]
    %v1701 = vld [vmem:[%s8 + $0x158] sm:$0xff]
    %v1702 = vld [vmem:[%s8 + $0x160] sm:$0xff]
    %v1703 = vld [vmem:[%s8 + $0x168] sm:$0xff]
    %v1704 = vld [vmem:[%s8 + $0x170] sm:$0xff]
    %v1705 = vld [vmem:[%s8 + $0x178] sm:$0xff]
    %v1706 = vld [vmem:[%s8 + $0x180] sm:$0xff]
    %v1707 = vld [vmem:[%s8 + $0x188] sm:$0xff]
    %v1708 = vld [vmem:[%s8 + $0x190] sm:$0xff]
    %v1709 = vld [vmem:[%s8 + $0x198] sm:$0xff]
    %v1710 = vld [vmem:[%s8 + $0x1a0] sm:$0xff]
    %v1711 = vld [vmem:[%s8 + $0x1a8] sm:$0xff]
    %v1712 = vld [vmem:[%s8 + $0x1b0] sm:$0xff]
    %v1713 = vld [vmem:[%s8 + $0x1b8] sm:$0xff]
    %v1714 = vld [vmem:[%s8 + $0x1c0] sm:$0xff]
    %v1715 = vld [vmem:[%s8 + $0x1c8] sm:$0xff]
    %v1716 = vld [vmem:[%s8 + $0x1d0] sm:$0xff]
    %v1717 = vld [vmem:[%s8 + $0x1d8] sm:$0xff]
    %v1718 = vld [vmem:[%s8 + $0x1e0] sm:$0xff]
    %v1719 = vld [vmem:[%s8 + $0x1e8] sm:$0xff]
    %v1720 = vld [vmem:[%s8 + $0x1f0] sm:$0xff]
    %v1721 = vld [vmem:[%s8 + $0x1f8] sm:$0xff]
    %1722 = vmatprep.subr.mxu0 0.0
    %1723 = vmatpush1.msra.mxu0 %v1673
    %1724 = vmatprep.subr.mxu0 0.0
    %1725 = vmatpush1.msra.mxu0 %v1672
    %1726 = vmatprep.subr.mxu0 0.0
    %1727 = vmatpush1.msra.mxu0 %v1671
    %1728 = vmatprep.subr.mxu0 0.0
    %1729 = vmatpush1.msra.mxu0 %v1670
    %1730 = vmatprep.subr.mxu0 0.0
    %1731 = vmatpush1.msra.mxu0 %v1669
    %1732 = vmatprep.subr.mxu0 0.0
    %1733 = vmatpush1.msra.mxu0 %v1668
    %1734 = vmatprep.subr.mxu0 0.0
    %1735 = vmatpush1.msra.mxu0 %v1667
    %1736 = vmatprep.subr.mxu0 0.0
    %1737 = vmatpush1.msra.mxu0 %v1666
    %1738 = vmatprep.subr.mxu0 0.0
    %1739 = vmatpush1.msra.mxu0 %v1665
    %1740 = vmatprep.subr.mxu0 0.0
    %1741 = vmatpush1.msra.mxu0 %v1664
    %1742 = vmatprep.subr.mxu0 0.0
    %1743 = vmatpush1.msra.mxu0 %v1663
    %1744 = vmatprep.subr.mxu0 0.0
    %1745 = vmatpush1.msra.mxu0 %v1662
    %1746 = vmatprep.subr.mxu0 0.0
    %1747 = vmatpush1.msra.mxu0 %v1661
    %1748 = vmatprep.subr.mxu0 0.0
    %1749 = vmatpush1.msra.mxu0 %v1660
    %1750 = vmatprep.subr.mxu0 0.0
    %1751 = vmatpush1.msra.mxu0 %v1659
    %1752 = vmatprep.subr.mxu0 0.0
    %1753 = vmatpush1.msra.mxu0 %v1658
    %1754 = vmatprep.subr.mxu0 0.0
    %1755 = vmatpush2.msra.mxu0 %v1689
    %1756 = vmatprep.subr.mxu0 0.0
    %1757 = vmatpush2.msra.mxu0 %v1688
    %1758 = vmatprep.subr.mxu0 0.0
    %1759 = vmatpush2.msra.mxu0 %v1687
    %1760 = vmatprep.subr.mxu0 0.0
    %1761 = vmatpush2.msra.mxu0 %v1686
    %1762 = vmatprep.subr.mxu0 0.0
    %1763 = vmatpush2.msra.mxu0 %v1685
    %1764 = vmatprep.subr.mxu0 0.0
    %1765 = vmatpush2.msra.mxu0 %v1684
    %1766 = vmatprep.subr.mxu0 0.0
    %1767 = vmatpush2.msra.mxu0 %v1683
    %1768 = vmatprep.subr.mxu0 0.0
    %1769 = vmatpush2.msra.mxu0 %v1682
    %1770 = vmatprep.subr.mxu0 0.0
    %1771 = vmatpush2.msra.mxu0 %v1681
    %1772 = vmatprep.subr.mxu0 0.0
    %1773 = vmatpush2.msra.mxu0 %v1680
    %1774 = vmatprep.subr.mxu0 0.0
    %1775 = vmatpush2.msra.mxu0 %v1679
    %1776 = vmatprep.subr.mxu0 0.0
    %1777 = vmatpush2.msra.mxu0 %v1678
    %1778 = vmatprep.subr.mxu0 0.0
    %1779 = vmatpush2.msra.mxu0 %v1677
    %1780 = vmatprep.subr.mxu0 0.0
    %1781 = vmatpush2.msra.mxu0 %v1676
    %1782 = vmatprep.subr.mxu0 0.0
    %1783 = vmatpush2.msra.mxu0 %v1675
    %1784 = vmatprep.subr.mxu0 0.0
    %1785 = vmatpush2.msra.mxu0 %v1674
    %1786 = vmatprep.mubr.f32.mxu0 %v1643
    %1787 = vmatmul.mubr.f32.gmra.mxu0 %v1642
    %v1788 = vpop.f32.mrf.mxu0
    %v1789 = vadd.f32 0.0, %v1788
    %v1790 = vpop.f32.mrf.mxu0
    %1791 = vmatprep.mubr.f32.mxu0 %v1647
    %1792 = vmatmul.mubr.f32.gmra.mxu0 %v1646
    %v1793 = vpop.f32.mrf.mxu0
    %v1794 = vadd.f32 0.0, %v1793
    %v1795 = vpop.f32.mrf.mxu0
    %1796 = vmatprep.mubr.f32.mxu0 %v1651
    %1797 = vmatmul.mubr.f32.gmra.mxu0 %v1650
    %v1798 = vpop.f32.mrf.mxu0
    %v1799 = vadd.f32 0.0, %v1798
    %v1800 = vpop.f32.mrf.mxu0
    %1801 = vmatprep.mubr.f32.mxu0 %v1655
    %1802 = vmatmul.mubr.f32.gmra.mxu0 %v1654
    %v1803 = vpop.f32.mrf.mxu0
    %v1804 = vadd.f32 0.0, %v1803
    %v1805 = vpop.f32.mrf.mxu0
    %1806 = vdwg.mxu0
    %1807 = vmatprep.subr.mxu0 0.0
    %1808 = vmatpush1.msra.mxu0 %v1705
    %1809 = vmatprep.subr.mxu0 0.0
    %1810 = vmatpush1.msra.mxu0 %v1704
    %1811 = vmatprep.subr.mxu0 0.0
    %1812 = vmatpush1.msra.mxu0 %v1703
    %1813 = vmatprep.subr.mxu0 0.0
    %1814 = vmatpush1.msra.mxu0 %v1702
    %1815 = vmatprep.subr.mxu0 0.0
    %1816 = vmatpush1.msra.mxu0 %v1701
    %1817 = vmatprep.subr.mxu0 0.0
    %1818 = vmatpush1.msra.mxu0 %v1700
    %1819 = vmatprep.subr.mxu0 0.0
    %1820 = vmatpush1.msra.mxu0 %v1699
    %1821 = vmatprep.subr.mxu0 0.0
    %1822 = vmatpush1.msra.mxu0 %v1698
    %1823 = vmatprep.subr.mxu0 0.0
    %1824 = vmatpush1.msra.mxu0 %v1697
    %1825 = vmatprep.subr.mxu0 0.0
    %1826 = vmatpush1.msra.mxu0 %v1696
    %1827 = vmatprep.subr.mxu0 0.0
    %1828 = vmatpush1.msra.mxu0 %v1695
    %1829 = vmatprep.subr.mxu0 0.0
    %1830 = vmatpush1.msra.mxu0 %v1694
    %1831 = vmatprep.subr.mxu0 0.0
    %1832 = vmatpush1.msra.mxu0 %v1693
    %1833 = vmatprep.subr.mxu0 0.0
    %1834 = vmatpush1.msra.mxu0 %v1692
    %1835 = vmatprep.subr.mxu0 0.0
    %1836 = vmatpush1.msra.mxu0 %v1691
    %1837 = vmatprep.subr.mxu0 0.0
    %1838 = vmatpush1.msra.mxu0 %v1690
    %1839 = vmatprep.subr.mxu0 0.0
    %1840 = vmatpush2.msra.mxu0 %v1721
    %1841 = vmatprep.subr.mxu0 0.0
    %1842 = vmatpush2.msra.mxu0 %v1720
    %1843 = vmatprep.subr.mxu0 0.0
    %1844 = vmatpush2.msra.mxu0 %v1719
    %1845 = vmatprep.subr.mxu0 0.0
    %1846 = vmatpush2.msra.mxu0 %v1718
    %1847 = vmatprep.subr.mxu0 0.0
    %1848 = vmatpush2.msra.mxu0 %v1717
    %1849 = vmatprep.subr.mxu0 0.0
    %1850 = vmatpush2.msra.mxu0 %v1716
    %1851 = vmatprep.subr.mxu0 0.0
    %1852 = vmatpush2.msra.mxu0 %v1715
    %1853 = vmatprep.subr.mxu0 0.0
    %1854 = vmatpush2.msra.mxu0 %v1714
    %1855 = vmatprep.subr.mxu0 0.0
    %1856 = vmatpush2.msra.mxu0 %v1713
    %1857 = vmatprep.subr.mxu0 0.0
    %1858 = vmatpush2.msra.mxu0 %v1712
    %1859 = vmatprep.subr.mxu0 0.0
    %1860 = vmatpush2.msra.mxu0 %v1711
    %1861 = vmatprep.subr.mxu0 0.0
    %1862 = vmatpush2.msra.mxu0 %v1710
    %1863 = vmatprep.subr.mxu0 0.0
    %1864 = vmatpush2.msra.mxu0 %v1709
    %1865 = vmatprep.subr.mxu0 0.0
    %1866 = vmatpush2.msra.mxu0 %v1708
    %1867 = vmatprep.subr.mxu0 0.0
    %1868 = vmatpush2.msra.mxu0 %v1707
    %1869 = vmatprep.subr.mxu0 0.0
    %1870 = vmatpush2.msra.mxu0 %v1706
    %1871 = vmatprep.mubr.f32.mxu0 %v1645
    %1872 = vmatmul.mubr.f32.gmra.mxu0 %v1644
    %v1873 = vpop.f32.mrf.mxu0
    %v1874 = vadd.f32 %v1789, %v1873
    %v1875 = vpop.f32.mrf.mxu0
    %1876 = vmatprep.mubr.f32.mxu0 %v1649
    %1877 = vmatmul.mubr.f32.gmra.mxu0 %v1648
    %v1878 = vpop.f32.mrf.mxu0
    %v1879 = vadd.f32 %v1794, %v1878
    %v1880 = vpop.f32.mrf.mxu0
    %1881 = vmatprep.mubr.f32.mxu0 %v1653
    %1882 = vmatmul.mubr.f32.gmra.mxu0 %v1652
    %v1883 = vpop.f32.mrf.mxu0
    %v1884 = vadd.f32 %v1799, %v1883
    %v1885 = vpop.f32.mrf.mxu0
    %1886 = vmatprep.mubr.f32.mxu0 %v1657
    %1887 = vmatmul.mubr.f32.gmra.mxu0 %v1656
    %v1888 = vpop.f32.mrf.mxu0
    %v1889 = vadd.f32 %v1804, %v1888
    %v1890 = vpop.f32.mrf.mxu0
    %1891 = vdwg.mxu0
    %1892 = vst.msk [vmem:[#allocation2] sm:$0xff] %vm104, %v1874
    %1893 = vst.msk [vmem:[#allocation2 + $0x8] sm:$0xff] %vm104, %v1879
    %1894 = vst.msk [vmem:[#allocation2 + $0x10] sm:$0xff] %vm104, %v1884
    %1895 = vst.msk [vmem:[#allocation2 + $0x18] sm:$0xff] %vm104, %v1889
    // Predicated region
    $region38: #{tpu_custom_call.1} parent=1 // pred_check
      _
    $region39: #{tpu_custom_call.1} parent=1 // pred_check_branch
      %1897 = sbr.rel (0) target = $region41
    $region40: #{tpu_custom_call.1} parent=1 // pred_region
      %s1899 = ssub.s32 512, 512
      %1900 = vsyncadd [#allocation3], %s1899
      %s1901 = sshll.u32 [#allocation2], 4
      %s1902 = int_to_ptr.vmem [resolvable:$true] %s1901
      %1907 = dma.vmem_to_hbm [thread:$0]  %s1902, 512, %s9, [#allocation3], 128, 128, 8
    $region41: #{tpu_custom_call.1} parent=1 // pred_fallthru
      _
    // Predicated region
    $region42: #{tpu_custom_call.1} parent=1 // pred_check
      _
    $region43: #{tpu_custom_call.1} parent=1 // pred_check_branch
      %1909 = sbr.rel (0) target = $region45
    $region44: #{tpu_custom_call.1} parent=1 // pred_region
      %1910 = dma.done [#allocation3], 512
    $region45: #{tpu_custom_call.1} parent=1 // pred_fallthru
      _
    %1911 = vsyncpa [#allocation3], 1

</llo_original>
